<compile_context>
chip_gen: v7x
topology: tpu7x:2x2x1
jax: 0.10.0
libtpu: 0.0.40
codegen_flags: <defaults>
</compile_context>

<pallas_src>
import math

import jax
import jax.numpy as jnp
from jax.experimental import pallas as pl
from jax.experimental.pallas import tpu as pltpu

EPS = 1.1920929e-07          # torch.finfo(float32).eps (nn.RMSNorm eps=None)
MATMUL_DTYPE = jnp.bfloat16  # MXU operand dtype; accumulation stays float32


# ------------------------------ fused kernel --------------------------------

def decoder_layer_kernel(x_ref, gq_ref, gk_ref, mask_ref,
                         wk_ref, wv_ref, wq_ref, wo_ref, nw_ref,
                         wf1_ref, bf1_ref, wg1_ref, wg2_ref, wg3_ref,
                         wf2_ref, bf2_ref, o_ref):
    S, E = x_ref.shape[1], x_ref.shape[2]
    HE = wq_ref.shape[1]
    H = HE // E

    def mm(a, b):            # bf16 operands on the MXU, f32 accumulate
        return jnp.dot(a.astype(MATMUL_DTYPE), b.astype(MATMUL_DTYPE),
                       preferred_element_type=jnp.float32)

    def mm_nt(a, b):         # a @ b.T without materializing the transpose
        return jax.lax.dot_general(
            a.astype(MATMUL_DTYPE), b.astype(MATMUL_DTYPE),
            dimension_numbers=(((1,), (1,)), ((), ())),
            preferred_element_type=jnp.float32)

    def rmsnorm(z):          # RMSNorm(z) * weight, f32 epilogue
        ms = jnp.mean(z * z, axis=-1, keepdims=True)
        return z * jax.lax.rsqrt(ms + EPS) * nw_ref[...]

    x = x_ref[0]                                    # (S, E) for this batch

    # ---- MQA projections (bias=False); rotary pair-mix + 1/sqrt(E) already
    #      folded into wq/wk, only the per-position cos/sin gain remains -----
    v = mm(x, wv_ref[...])                          # (S, E)
    q_rot = gq_ref[...] * mm(x, wq_ref[...])        # (S, H*E) all query heads
    k_rot = gk_ref[...] * mm(x, wk_ref[...])        # (S, E)

    # ---- attention: fold the H query heads into the M (row) dimension ------
    q_hs = jnp.concatenate(
        [q_rot[:, h * E:(h + 1) * E] for h in range(H)], axis=0)   # (H*S, E)
    scores = mm_nt(q_hs, k_rot) + mask_ref[...]                    # (H*S, S)

    # softmax: exp on the VPU, reciprocal on the EUP — no O(S^2) divide
    m = jnp.max(scores, axis=-1, keepdims=True)
    p = jnp.exp(scores - m)
    denom = jnp.sum(p, axis=-1, keepdims=True)
    probs = p * pl.reciprocal(denom, approx=True)                  # (H*S, S)

    ctx = mm(probs, v)                                             # (H*S, E)

    # back to the concatenated-heads layout (S, H*E): lane-dense, stays in VMEM
    attn_cat = jnp.concatenate(
        [ctx[h * S:(h + 1) * S, :] for h in range(H)], axis=1)     # (S, H*E)
    mqa_out = mm(attn_cat, wo_ref[...])                            # (S, E)

    h1 = rmsnorm(x + mqa_out)                                      # (S, E)

    # ---- FFN: Linear(E->4E)+b, GeGLU(4E), Linear(4E->E)+b  (4E = 128 lanes)
    f1 = mm(h1, wf1_ref[...]) + bf1_ref[...]                       # (S, 4E)
    a = mm(f1, wg1_ref[...])
    u = mm(f1, wg2_ref[...])
    gelu_a = 0.5 * a * (1.0 + jax.lax.erf(a * (1.0 / math.sqrt(2.0))))
    g = mm(gelu_a * u, wg3_ref[...])                               # (S, 4E)
    f2 = mm(g, wf2_ref[...]) + bf2_ref[...]                        # (S, E)

    # TODO(synk): both nn.Dropout layers are identity (eval semantics).
    o_ref[0] = rmsnorm(h1 + f2)


# ------------------------------ host-side glue -------------------------------

def rotary_constants(S, E, H):
    """Factor RotaryEmbeddings.init_matrix as  matrix[s] @ x == gain[s]*(x @ MIX).

    (x @ MIX)[2j] = x[2j] + x[2j+1];  (x @ MIX)[2j+1] = x[2j+1] - x[2j]
    gain[s, d]    = cos(a_s) (even d) / sin(a_s) (odd d), one angle per position
    (broadcast over pairs and heads), exactly as in the reference code.
    MIX (constant, linear) is folded into the projection weights host-side.
    """
    pos = jnp.arange(S, dtype=jnp.float32)[:, None]                 # (S, 1)
    theta = 10000.0 ** (-2.0 * (pos - 1.0) / float(E))
    ang = pos * theta
    cos, sin = jnp.cos(ang), jnp.sin(ang)

    def gain(D):
        even = (jnp.arange(D) % 2 == 0)[None, :]
        return jnp.where(even, cos, sin)                            # (S, D)

    def mix(D):
        i = jnp.arange(D)[:, None]        # input (row) index
        o = jnp.arange(D)[None, :]        # output (column) index
        m = (i == o).astype(jnp.float32)
        m = m + ((o % 2 == 0) & (i == o + 1)).astype(jnp.float32)
        m = m - ((o % 2 == 1) & (i == o - 1)).astype(jnp.float32)
        return m                                                    # (D, D)

    return gain(H * E), gain(E), mix(H * E), mix(E)


def decoder_layer(x, p):
    B, S, E = x.shape
    HE = p['w_q'].shape[1]
    H = HE // E
    gq, gk, mixq, mixk = rotary_constants(S, E, H)

    def bf16(w):
        return w.astype(MATMUL_DTYPE)

    # Fold rotary pair-mix (and the 1/sqrt(E) attention scale) into the q/k
    # projection weights; pre-cast every MXU weight operand to bf16.
    wq_m = bf16((p['w_q'] @ mixq) * (1.0 / math.sqrt(E)))           # (E, H*E)
    wk_m = bf16(p['w_k'] @ mixk)                                    # (E, E)

    # Additive causal mask for all H heads stacked along rows: (H*S, S).
    causal = jnp.tril(jnp.ones((S, S), dtype=bool))
    mask = jnp.where(jnp.tile(causal, (H, 1)), jnp.float32(0.0),
                     jnp.float32(-jnp.inf))

    def const(shape):   # whole array, same VMEM block for every grid step
        return pl.BlockSpec(shape, lambda b: (0,) * len(shape))

    return pl.pallas_call(
        decoder_layer_kernel,
        grid=(B,),
        in_specs=[
            pl.BlockSpec((1, S, E), lambda b: (b, 0, 0)),     # x: one batch/step
            const((S, HE)), const((S, E)),                    # rotary gains
            const((H * S, S)),                                # causal mask bias
            const((E, E)), const((E, E)),                     # w_k(mixed), w_v
            const((E, HE)), const((HE, E)),                   # w_q(mixed), w_o
            const((1, E)),                                    # RMSNorm weight
            const((E, 4 * E)), const((1, 4 * E)),             # FFN linear1 (+b)
            const((4 * E, 4 * E)), const((4 * E, 4 * E)), const((4 * E, 4 * E)),
            const((4 * E, E)), const((1, E)),                 # FFN linear2 (+b)
        ],
        out_specs=pl.BlockSpec((1, S, E), lambda b: (b, 0, 0)),
        out_shape=jax.ShapeDtypeStruct((B, S, E), jnp.float32),
        compiler_params=pltpu.CompilerParams(
            dimension_semantics=("parallel",)),
    )(x, gq, gk, mask,
      wk_m, bf16(p['w_v']), wq_m, bf16(p['w_o']), p['norm_w'],
      bf16(p['w_f1']), p['b_f1'],
      bf16(p['w_g1']), bf16(p['w_g2']), bf16(p['w_g3']),
      bf16(p['w_f2']), p['b_f2'])


def init_params(key, E, H):
    ks = jax.random.split(key, 11)
    s = 0.02
    p = {}
    p['w_k'] = jax.random.normal(ks[0], (E, E), jnp.float32) * s
    p['w_v'] = jax.random.normal(ks[1], (E, E), jnp.float32) * s
    # TODO(synk): the PyTorch forward re-randomizes the per-head query Linears
    # on every call; here they are fixed deterministic weights stored
    # concatenated as (E, H*E).
    p['w_q'] = jax.random.normal(ks[2], (E, H * E), jnp.float32) * s
    p['w_o'] = jax.random.normal(ks[3], (H * E, E), jnp.float32) * s
    # TODO(synk): RMSNorm class is not defined in the reference snippet;
    # assuming torch.nn.RMSNorm semantics (learnable weight, eps = f32 eps).
    p['norm_w'] = jnp.ones((1, E), jnp.float32)
    p['w_f1'] = jax.random.normal(ks[4], (E, 4 * E), jnp.float32) * s
    p['b_f1'] = jax.random.normal(ks[5], (1, 4 * E), jnp.float32) * s
    p['w_g1'] = jax.random.normal(ks[6], (4 * E, 4 * E), jnp.float32) * s
    p['w_g2'] = jax.random.normal(ks[7], (4 * E, 4 * E), jnp.float32) * s
    p['w_g3'] = jax.random.normal(ks[8], (4 * E, 4 * E), jnp.float32) * s
    p['w_f2'] = jax.random.normal(ks[9], (4 * E, E), jnp.float32) * s
    p['b_f2'] = jax.random.normal(ks[10], (1, E), jnp.float32) * s
    return p


def decoder_layer_ref(x, p):
    """Pure-JAX f32 reference mirroring the PyTorch module's forward pass."""
    B, S, E = x.shape
    HE = p['w_q'].shape[1]
    H = HE // E

    pos = jnp.arange(S, dtype=jnp.float32)[:, None]
    theta = 10000.0 ** (-2.0 * (pos - 1.0) / float(E))
    ang = pos * theta
    cos, sin = jnp.cos(ang), jnp.sin(ang)                  # (S, 1)

    def rot(t):                                            # rotary per position
        te, to = t[..., 0::2], t[..., 1::2]
        re = cos * (te + to)
        ro = sin * (to - te)
        return jnp.stack([re, ro], axis=-1).reshape(t.shape)

    def rmsn(z):
        return z * jax.lax.rsqrt(
            jnp.mean(z * z, axis=-1, keepdims=True) + EPS) * p['norm_w']

    k = x @ p['w_k']
    v = x @ p['w_v']
    q = (x @ p['w_q']).reshape(B, S, H, E).transpose(0, 2, 1, 3)   # (B,H,S,E)
    q_rot, k_rot = rot(q), rot(k)
    scores = jnp.einsum('bhqe,bke->bhqk', q_rot, k_rot)
    causal = jnp.tril(jnp.ones((S, S), bool))
    scores = jnp.where(causal, scores, -jnp.inf) / jnp.sqrt(jnp.float32(E))
    probs = jax.nn.softmax(scores, axis=-1)
    ctx = jnp.einsum('bhqk,bke->bhqe', probs, v)
    attn_cat = ctx.transpose(0, 2, 1, 3).reshape(B, S, HE)
    h1 = rmsn(x + attn_cat @ p['w_o'])

    f1 = h1 @ p['w_f1'] + p['b_f1']
    a = f1 @ p['w_g1']
    gelu_a = 0.5 * a * (1.0 + jax.lax.erf(a / math.sqrt(2.0)))
    g = (gelu_a * (f1 @ p['w_g2'])) @ p['w_g3']
    f2 = g @ p['w_f2'] + p['b_f2']
    return rmsn(h1 + f2)


if __name__ == "__main__":
    # seq = 8, embed = 32, 6 query heads (= no_of_heads 12 // no_kv_heads 2)
    B, S, E, H = 2, 8, 32, 6
    key = jax.random.PRNGKey(0)
    kx, kp = jax.random.split(key)
    x = jax.random.normal(kx, (B, S, E), jnp.float32)
    params = init_params(kp, E, H)

    out = jax.jit(lambda xx: decoder_layer(xx, params))(x)
    jax.block_until_ready(out)
    assert out.shape == (B, S, E)

    # pure-JAX reference check (kernel uses bf16 matmul operands + approx
    # reciprocal, hence the loose tolerance).
    ref = decoder_layer_ref(x, params)
    err = float(jnp.max(jnp.abs(out - ref)))
    assert err < 5e-2, f"kernel/reference mismatch: max abs err = {err}"
    print("KERNEL_OK")
</pallas_src>

<mosaic_0001>
module attributes {stable_mosaic.version = 11 : i64} {
  func.func @decoder_layer_kernel(%arg0: i32, %arg1: memref<1x8x32xf32, #tpu.memory_space<vmem>>, %arg2: memref<8x192xf32, #tpu.memory_space<vmem>>, %arg3: memref<8x32xf32, #tpu.memory_space<vmem>>, %arg4: memref<48x8xf32, #tpu.memory_space<vmem>>, %arg5: memref<32x32xbf16, #tpu.memory_space<vmem>>, %arg6: memref<32x32xbf16, #tpu.memory_space<vmem>>, %arg7: memref<32x192xbf16, #tpu.memory_space<vmem>>, %arg8: memref<192x32xbf16, #tpu.memory_space<vmem>>, %arg9: memref<1x32xf32, #tpu.memory_space<vmem>>, %arg10: memref<32x128xbf16, #tpu.memory_space<vmem>>, %arg11: memref<1x128xf32, #tpu.memory_space<vmem>>, %arg12: memref<128x128xbf16, #tpu.memory_space<vmem>>, %arg13: memref<128x128xbf16, #tpu.memory_space<vmem>>, %arg14: memref<128x128xbf16, #tpu.memory_space<vmem>>, %arg15: memref<128x32xbf16, #tpu.memory_space<vmem>>, %arg16: memref<1x32xf32, #tpu.memory_space<vmem>>, %arg17: memref<1x8x32xf32, #tpu.memory_space<vmem>>) attributes {dimension_semantics = [#tpu.dimension_semantics<parallel>], iteration_bounds = array<i64: 2>, scalar_prefetch = 0 : i64, scratch_operands = 0 : i64, tpu.core_type = #tpu.core_type<tc>, window_params = [{transform_indices = @transform_0, window_bounds = array<i64: 1, 8, 32>}, {pipeline_mode = #tpu.pipeline_mode<synchronous>, transform_indices = @transform_1, window_bounds = array<i64: 8, 192>}, {pipeline_mode = #tpu.pipeline_mode<synchronous>, transform_indices = @transform_2, window_bounds = array<i64: 8, 32>}, {pipeline_mode = #tpu.pipeline_mode<synchronous>, transform_indices = @transform_3, window_bounds = array<i64: 48, 8>}, {pipeline_mode = #tpu.pipeline_mode<synchronous>, transform_indices = @transform_4, window_bounds = array<i64: 32, 32>}, {pipeline_mode = #tpu.pipeline_mode<synchronous>, transform_indices = @transform_5, window_bounds = array<i64: 32, 32>}, {pipeline_mode = #tpu.pipeline_mode<synchronous>, transform_indices = @transform_6, window_bounds = array<i64: 32, 192>}, {pipeline_mode = #tpu.pipeline_mode<synchronous>, transform_indices = @transform_7, window_bounds = array<i64: 192, 32>}, {pipeline_mode = #tpu.pipeline_mode<synchronous>, transform_indices = @transform_8, window_bounds = array<i64: 1, 32>}, {pipeline_mode = #tpu.pipeline_mode<synchronous>, transform_indices = @transform_9, window_bounds = array<i64: 32, 128>}, {pipeline_mode = #tpu.pipeline_mode<synchronous>, transform_indices = @transform_10, window_bounds = array<i64: 1, 128>}, {pipeline_mode = #tpu.pipeline_mode<synchronous>, transform_indices = @transform_11, window_bounds = array<i64: 128, 128>}, {pipeline_mode = #tpu.pipeline_mode<synchronous>, transform_indices = @transform_12, window_bounds = array<i64: 128, 128>}, {pipeline_mode = #tpu.pipeline_mode<synchronous>, transform_indices = @transform_13, window_bounds = array<i64: 128, 128>}, {pipeline_mode = #tpu.pipeline_mode<synchronous>, transform_indices = @transform_14, window_bounds = array<i64: 128, 32>}, {pipeline_mode = #tpu.pipeline_mode<synchronous>, transform_indices = @transform_15, window_bounds = array<i64: 1, 32>}, {transform_indices = @transform_16, window_bounds = array<i64: 1, 8, 32>}]} {
    %c0 = arith.constant 0 : index
    %c0_0 = arith.constant 0 : index
    %c0_1 = arith.constant 0 : index
    %0 = vector.load %arg1[%c0, %c0_0, %c0_1] : memref<1x8x32xf32, #tpu.memory_space<vmem>>, vector<1x8x32xf32>
    %1 = vector.shape_cast %0 : vector<1x8x32xf32> to vector<8x32xf32>
    %c0_2 = arith.constant 0 : index
    %c0_3 = arith.constant 0 : index
    %2 = vector.load %arg6[%c0_2, %c0_3] : memref<32x32xbf16, #tpu.memory_space<vmem>>, vector<32x32xbf16>
    %3 = arith.truncf %1 : vector<8x32xf32> to vector<8x32xbf16>
    %cst = arith.constant dense<0.000000e+00> : vector<8x32xf32>
    %4 = tpu.matmul %3, %2, %cst {dimension_numbers = #tpu.dot_dimension_numbers<[1], [0], [0], [1], [0, 0, 1, 1], [], []>} : vector<8x32xbf16>, vector<32x32xbf16>, vector<8x32xf32> -> vector<8x32xf32>
    %c0_4 = arith.constant 0 : index
    %c0_5 = arith.constant 0 : index
    %5 = vector.load %arg2[%c0_4, %c0_5] : memref<8x192xf32, #tpu.memory_space<vmem>>, vector<8x192xf32>
    %c0_6 = arith.constant 0 : index
    %c0_7 = arith.constant 0 : index
    %6 = vector.load %arg7[%c0_6, %c0_7] : memref<32x192xbf16, #tpu.memory_space<vmem>>, vector<32x192xbf16>
    %7 = arith.truncf %1 : vector<8x32xf32> to vector<8x32xbf16>
    %cst_8 = arith.constant dense<0.000000e+00> : vector<8x192xf32>
    %8 = tpu.matmul %7, %6, %cst_8 {dimension_numbers = #tpu.dot_dimension_numbers<[1], [0], [0], [1], [0, 0, 1, 1], [], []>} : vector<8x32xbf16>, vector<32x192xbf16>, vector<8x192xf32> -> vector<8x192xf32>
    %9 = arith.mulf %5, %8 : vector<8x192xf32>
    %c0_9 = arith.constant 0 : index
    %c0_10 = arith.constant 0 : index
    %10 = vector.load %arg3[%c0_9, %c0_10] : memref<8x32xf32, #tpu.memory_space<vmem>>, vector<8x32xf32>
    %c0_11 = arith.constant 0 : index
    %c0_12 = arith.constant 0 : index
    %11 = vector.load %arg5[%c0_11, %c0_12] : memref<32x32xbf16, #tpu.memory_space<vmem>>, vector<32x32xbf16>
    %12 = arith.truncf %1 : vector<8x32xf32> to vector<8x32xbf16>
    %cst_13 = arith.constant dense<0.000000e+00> : vector<8x32xf32>
    %13 = tpu.matmul %12, %11, %cst_13 {dimension_numbers = #tpu.dot_dimension_numbers<[1], [0], [0], [1], [0, 0, 1, 1], [], []>} : vector<8x32xbf16>, vector<32x32xbf16>, vector<8x32xf32> -> vector<8x32xf32>
    %14 = arith.mulf %10, %13 : vector<8x32xf32>
    %15 = vector.extract_strided_slice %9 {offsets = [0, 0], sizes = [8, 32], strides = [1, 1]} : vector<8x192xf32> to vector<8x32xf32>
    %16 = vector.extract_strided_slice %9 {offsets = [0, 32], sizes = [8, 32], strides = [1, 1]} : vector<8x192xf32> to vector<8x32xf32>
    %17 = vector.extract_strided_slice %9 {offsets = [0, 64], sizes = [8, 32], strides = [1, 1]} : vector<8x192xf32> to vector<8x32xf32>
    %18 = vector.extract_strided_slice %9 {offsets = [0, 96], sizes = [8, 32], strides = [1, 1]} : vector<8x192xf32> to vector<8x32xf32>
    %19 = vector.extract_strided_slice %9 {offsets = [0, 128], sizes = [8, 32], strides = [1, 1]} : vector<8x192xf32> to vector<8x32xf32>
    %20 = vector.extract_strided_slice %9 {offsets = [0, 160], sizes = [8, 32], strides = [1, 1]} : vector<8x192xf32> to vector<8x32xf32>
    %21 = tpu.concatenate %15, %16, %17, %18, %19, %20 in 0 : vector<8x32xf32>, vector<8x32xf32>, vector<8x32xf32>, vector<8x32xf32>, vector<8x32xf32>, vector<8x32xf32> -> vector<48x32xf32>
    %22 = arith.truncf %21 : vector<48x32xf32> to vector<48x32xbf16>
    %23 = arith.truncf %14 : vector<8x32xf32> to vector<8x32xbf16>
    %cst_14 = arith.constant dense<0.000000e+00> : vector<48x8xf32>
    %24 = tpu.matmul %22, %23, %cst_14 {dimension_numbers = #tpu.dot_dimension_numbers<[1], [1], [0], [0], [0, 0, 1, 0], [], []>} : vector<48x32xbf16>, vector<8x32xbf16>, vector<48x8xf32> -> vector<48x8xf32>
    %c0_15 = arith.constant 0 : index
    %c0_16 = arith.constant 0 : index
    %25 = vector.load %arg4[%c0_15, %c0_16] : memref<48x8xf32, #tpu.memory_space<vmem>>, vector<48x8xf32>
    %26 = arith.addf %24, %25 : vector<48x8xf32>
    %cst_17 = arith.constant dense<0xFF800000> : vector<48xf32>
    %27 = vector.multi_reduction <maximumf>, %26, %cst_17 [1] : vector<48x8xf32> to vector<48xf32>
    %28 = vector.shape_cast %27 : vector<48xf32> to vector<48x1xf32>
    %29 = vector.broadcast %28 : vector<48x1xf32> to vector<48x8xf32>
    %30 = arith.subf %26, %29 : vector<48x8xf32>
    %31 = math.exp %30 : vector<48x8xf32>
    %cst_18 = arith.constant dense<0.000000e+00> : vector<48xf32>
    %32 = vector.multi_reduction <add>, %31, %cst_18 [1] : vector<48x8xf32> to vector<48xf32>
    %33 = vector.shape_cast %32 : vector<48xf32> to vector<48x1xf32>
    %34 = tpu.reciprocal %33 {approx = true} : vector<48x1xf32> -> vector<48x1xf32>
    %35 = vector.broadcast %34 : vector<48x1xf32> to vector<48x8xf32>
    %36 = arith.mulf %31, %35 : vector<48x8xf32>
    %37 = arith.truncf %36 : vector<48x8xf32> to vector<48x8xbf16>
    %38 = arith.truncf %4 : vector<8x32xf32> to vector<8x32xbf16>
    %cst_19 = arith.constant dense<0.000000e+00> : vector<48x32xf32>
    %39 = tpu.matmul %37, %38, %cst_19 {dimension_numbers = #tpu.dot_dimension_numbers<[1], [0], [0], [1], [0, 0, 1, 1], [], []>} : vector<48x8xbf16>, vector<8x32xbf16>, vector<48x32xf32> -> vector<48x32xf32>
    %40 = vector.extract_strided_slice %39 {offsets = [0, 0], sizes = [8, 32], strides = [1, 1]} : vector<48x32xf32> to vector<8x32xf32>
    %41 = vector.extract_strided_slice %39 {offsets = [8, 0], sizes = [8, 32], strides = [1, 1]} : vector<48x32xf32> to vector<8x32xf32>
    %42 = vector.extract_strided_slice %39 {offsets = [16, 0], sizes = [8, 32], strides = [1, 1]} : vector<48x32xf32> to vector<8x32xf32>
    %43 = vector.extract_strided_slice %39 {offsets = [24, 0], sizes = [8, 32], strides = [1, 1]} : vector<48x32xf32> to vector<8x32xf32>
    %44 = vector.extract_strided_slice %39 {offsets = [32, 0], sizes = [8, 32], strides = [1, 1]} : vector<48x32xf32> to vector<8x32xf32>
    %45 = vector.extract_strided_slice %39 {offsets = [40, 0], sizes = [8, 32], strides = [1, 1]} : vector<48x32xf32> to vector<8x32xf32>
    %46 = tpu.concatenate %40, %41, %42, %43, %44, %45 in 1 : vector<8x32xf32>, vector<8x32xf32>, vector<8x32xf32>, vector<8x32xf32>, vector<8x32xf32>, vector<8x32xf32> -> vector<8x192xf32>
    %c0_20 = arith.constant 0 : index
    %c0_21 = arith.constant 0 : index
    %47 = vector.load %arg8[%c0_20, %c0_21] : memref<192x32xbf16, #tpu.memory_space<vmem>>, vector<192x32xbf16>
    %48 = arith.truncf %46 : vector<8x192xf32> to vector<8x192xbf16>
    %cst_22 = arith.constant dense<0.000000e+00> : vector<8x32xf32>
    %49 = tpu.matmul %48, %47, %cst_22 {dimension_numbers = #tpu.dot_dimension_numbers<[1], [0], [0], [1], [0, 0, 1, 1], [], []>} : vector<8x192xbf16>, vector<192x32xbf16>, vector<8x32xf32> -> vector<8x32xf32>
    %50 = arith.addf %1, %49 : vector<8x32xf32>
    %51 = arith.mulf %50, %50 : vector<8x32xf32>
    %cst_23 = arith.constant dense<0.000000e+00> : vector<8xf32>
    %52 = vector.multi_reduction <add>, %51, %cst_23 [1] : vector<8x32xf32> to vector<8xf32>
    %53 = vector.shape_cast %52 : vector<8xf32> to vector<8x1xf32>
    %cst_24 = arith.constant 3.200000e+01 : f32
    %54 = vector.broadcast %cst_24 : f32 to vector<8x1xf32>
    %55 = arith.divf %53, %54 : vector<8x1xf32>
    %cst_25 = arith.constant 1.1920929E-7 : f32
    %56 = vector.broadcast %cst_25 : f32 to vector<8x1xf32>
    %57 = arith.addf %55, %56 : vector<8x1xf32>
    %58 = math.rsqrt %57 : vector<8x1xf32>
    %59 = vector.broadcast %58 : vector<8x1xf32> to vector<8x32xf32>
    %60 = arith.mulf %50, %59 : vector<8x32xf32>
    %c0_26 = arith.constant 0 : index
    %c0_27 = arith.constant 0 : index
    %61 = vector.load %arg9[%c0_26, %c0_27] : memref<1x32xf32, #tpu.memory_space<vmem>>, vector<1x32xf32>
    %62 = vector.broadcast %61 : vector<1x32xf32> to vector<8x32xf32>
    %63 = arith.mulf %60, %62 : vector<8x32xf32>
    %c0_28 = arith.constant 0 : index
    %c0_29 = arith.constant 0 : index
    %64 = vector.load %arg10[%c0_28, %c0_29] : memref<32x128xbf16, #tpu.memory_space<vmem>>, vector<32x128xbf16>
    %65 = arith.truncf %63 : vector<8x32xf32> to vector<8x32xbf16>
    %cst_30 = arith.constant dense<0.000000e+00> : vector<8x128xf32>
    %66 = tpu.matmul %65, %64, %cst_30 {dimension_numbers = #tpu.dot_dimension_numbers<[1], [0], [0], [1], [0, 0, 1, 1], [], []>} : vector<8x32xbf16>, vector<32x128xbf16>, vector<8x128xf32> -> vector<8x128xf32>
    %c0_31 = arith.constant 0 : index
    %c0_32 = arith.constant 0 : index
    %67 = vector.load %arg11[%c0_31, %c0_32] : memref<1x128xf32, #tpu.memory_space<vmem>>, vector<1x128xf32>
    %68 = vector.broadcast %67 : vector<1x128xf32> to vector<8x128xf32>
    %69 = arith.addf %66, %68 : vector<8x128xf32>
    %c0_33 = arith.constant 0 : index
    %c0_34 = arith.constant 0 : index
    %70 = vector.load %arg12[%c0_33, %c0_34] : memref<128x128xbf16, #tpu.memory_space<vmem>>, vector<128x128xbf16>
    %71 = arith.truncf %69 : vector<8x128xf32> to vector<8x128xbf16>
    %cst_35 = arith.constant dense<0.000000e+00> : vector<8x128xf32>
    %72 = tpu.matmul %71, %70, %cst_35 {dimension_numbers = #tpu.dot_dimension_numbers<[1], [0], [0], [1], [0, 0, 1, 1], [], []>} : vector<8x128xbf16>, vector<128x128xbf16>, vector<8x128xf32> -> vector<8x128xf32>
    %c0_36 = arith.constant 0 : index
    %c0_37 = arith.constant 0 : index
    %73 = vector.load %arg13[%c0_36, %c0_37] : memref<128x128xbf16, #tpu.memory_space<vmem>>, vector<128x128xbf16>
    %74 = arith.truncf %69 : vector<8x128xf32> to vector<8x128xbf16>
    %cst_38 = arith.constant dense<0.000000e+00> : vector<8x128xf32>
    %75 = tpu.matmul %74, %73, %cst_38 {dimension_numbers = #tpu.dot_dimension_numbers<[1], [0], [0], [1], [0, 0, 1, 1], [], []>} : vector<8x128xbf16>, vector<128x128xbf16>, vector<8x128xf32> -> vector<8x128xf32>
    %cst_39 = arith.constant 5.000000e-01 : f32
    %76 = vector.broadcast %cst_39 : f32 to vector<8x128xf32>
    %77 = arith.mulf %76, %72 : vector<8x128xf32>
    %cst_40 = arith.constant 0.707106769 : f32
    %78 = vector.broadcast %cst_40 : f32 to vector<8x128xf32>
    %79 = arith.mulf %72, %78 : vector<8x128xf32>
    %80 = math.erf %79 : vector<8x128xf32>
    %cst_41 = arith.constant 1.000000e+00 : f32
    %81 = vector.broadcast %cst_41 : f32 to vector<8x128xf32>
    %82 = arith.addf %81, %80 : vector<8x128xf32>
    %83 = arith.mulf %77, %82 : vector<8x128xf32>
    %84 = arith.mulf %83, %75 : vector<8x128xf32>
    %c0_42 = arith.constant 0 : index
    %c0_43 = arith.constant 0 : index
    %85 = vector.load %arg14[%c0_42, %c0_43] : memref<128x128xbf16, #tpu.memory_space<vmem>>, vector<128x128xbf16>
    %86 = arith.truncf %84 : vector<8x128xf32> to vector<8x128xbf16>
    %cst_44 = arith.constant dense<0.000000e+00> : vector<8x128xf32>
    %87 = tpu.matmul %86, %85, %cst_44 {dimension_numbers = #tpu.dot_dimension_numbers<[1], [0], [0], [1], [0, 0, 1, 1], [], []>} : vector<8x128xbf16>, vector<128x128xbf16>, vector<8x128xf32> -> vector<8x128xf32>
    %c0_45 = arith.constant 0 : index
    %c0_46 = arith.constant 0 : index
    %88 = vector.load %arg15[%c0_45, %c0_46] : memref<128x32xbf16, #tpu.memory_space<vmem>>, vector<128x32xbf16>
    %89 = arith.truncf %87 : vector<8x128xf32> to vector<8x128xbf16>
    %cst_47 = arith.constant dense<0.000000e+00> : vector<8x32xf32>
    %90 = tpu.matmul %89, %88, %cst_47 {dimension_numbers = #tpu.dot_dimension_numbers<[1], [0], [0], [1], [0, 0, 1, 1], [], []>} : vector<8x128xbf16>, vector<128x32xbf16>, vector<8x32xf32> -> vector<8x32xf32>
    %c0_48 = arith.constant 0 : index
    %c0_49 = arith.constant 0 : index
    %91 = vector.load %arg16[%c0_48, %c0_49] : memref<1x32xf32, #tpu.memory_space<vmem>>, vector<1x32xf32>
    %92 = vector.broadcast %91 : vector<1x32xf32> to vector<8x32xf32>
    %93 = arith.addf %90, %92 : vector<8x32xf32>
    %94 = arith.addf %63, %93 : vector<8x32xf32>
    %95 = arith.mulf %94, %94 : vector<8x32xf32>
    %cst_50 = arith.constant dense<0.000000e+00> : vector<8xf32>
    %96 = vector.multi_reduction <add>, %95, %cst_50 [1] : vector<8x32xf32> to vector<8xf32>
    %97 = vector.shape_cast %96 : vector<8xf32> to vector<8x1xf32>
    %cst_51 = arith.constant 3.200000e+01 : f32
    %98 = vector.broadcast %cst_51 : f32 to vector<8x1xf32>
    %99 = arith.divf %97, %98 : vector<8x1xf32>
    %cst_52 = arith.constant 1.1920929E-7 : f32
    %100 = vector.broadcast %cst_52 : f32 to vector<8x1xf32>
    %101 = arith.addf %99, %100 : vector<8x1xf32>
    %102 = math.rsqrt %101 : vector<8x1xf32>
    %103 = vector.broadcast %102 : vector<8x1xf32> to vector<8x32xf32>
    %104 = arith.mulf %94, %103 : vector<8x32xf32>
    %c0_53 = arith.constant 0 : index
    %c0_54 = arith.constant 0 : index
    %105 = vector.load %arg9[%c0_53, %c0_54] : memref<1x32xf32, #tpu.memory_space<vmem>>, vector<1x32xf32>
    %106 = vector.broadcast %105 : vector<1x32xf32> to vector<8x32xf32>
    %107 = arith.mulf %104, %106 : vector<8x32xf32>
    %c0_55 = arith.constant 0 : index
    %c0_56 = arith.constant 0 : index
    %c0_57 = arith.constant 0 : index
    %108 = vector.load %arg17[%c0_55, %c0_56, %c0_57] : memref<1x8x32xf32, #tpu.memory_space<vmem>>, vector<1x8x32xf32>
    %109 = vector.shape_cast %108 : vector<1x8x32xf32> to vector<8x32xf32>
    %110 = vector.shape_cast %107 : vector<8x32xf32> to vector<1x8x32xf32>
    tpu.vector_store %arg17[%c0_55, %c0_56, %c0_57], %110 {strides = array<i32>} : memref<1x8x32xf32, #tpu.memory_space<vmem>>, vector<1x8x32xf32>,
    return
  }
  func.func @transform_0(%arg0: i32) -> (i32, i32, i32) {
    %c0_i32 = arith.constant 0 : i32
    %c0_i32_0 = arith.constant 0 : i32
    %c0_i32_1 = arith.constant 0 : i32
    return %arg0, %c0_i32, %c0_i32_0 : i32, i32, i32
  }
  func.func @transform_1(%arg0: i32) -> (i32, i32) {
    %c0_i32 = arith.constant 0 : i32
    %c0_i32_0 = arith.constant 0 : i32
    %c0_i32_1 = arith.constant 0 : i32
    return %c0_i32, %c0_i32_0 : i32, i32
  }
  func.func @transform_2(%arg0: i32) -> (i32, i32) {
    %c0_i32 = arith.constant 0 : i32
    %c0_i32_0 = arith.constant 0 : i32
    %c0_i32_1 = arith.constant 0 : i32
    return %c0_i32, %c0_i32_0 : i32, i32
  }
  func.func @transform_3(%arg0: i32) -> (i32, i32) {
    %c0_i32 = arith.constant 0 : i32
    %c0_i32_0 = arith.constant 0 : i32
    %c0_i32_1 = arith.constant 0 : i32
    return %c0_i32, %c0_i32_0 : i32, i32
  }
  func.func @transform_4(%arg0: i32) -> (i32, i32) {
    %c0_i32 = arith.constant 0 : i32
    %c0_i32_0 = arith.constant 0 : i32
    %c0_i32_1 = arith.constant 0 : i32
    return %c0_i32, %c0_i32_0 : i32, i32
  }
  func.func @transform_5(%arg0: i32) -> (i32, i32) {
    %c0_i32 = arith.constant 0 : i32
    %c0_i32_0 = arith.constant 0 : i32
    %c0_i32_1 = arith.constant 0 : i32
    return %c0_i32, %c0_i32_0 : i32, i32
  }
  func.func @transform_6(%arg0: i32) -> (i32, i32) {
    %c0_i32 = arith.constant 0 : i32
    %c0_i32_0 = arith.constant 0 : i32
    %c0_i32_1 = arith.constant 0 : i32
    return %c0_i32, %c0_i32_0 : i32, i32
  }
  func.func @transform_7(%arg0: i32) -> (i32, i32) {
    %c0_i32 = arith.constant 0 : i32
    %c0_i32_0 = arith.constant 0 : i32
    %c0_i32_1 = arith.constant 0 : i32
    return %c0_i32, %c0_i32_0 : i32, i32
  }
  func.func @transform_8(%arg0: i32) -> (i32, i32) {
    %c0_i32 = arith.constant 0 : i32
    %c0_i32_0 = arith.constant 0 : i32
    %c0_i32_1 = arith.constant 0 : i32
    return %c0_i32, %c0_i32_0 : i32, i32
  }
  func.func @transform_9(%arg0: i32) -> (i32, i32) {
    %c0_i32 = arith.constant 0 : i32
    %c0_i32_0 = arith.constant 0 : i32
    %c0_i32_1 = arith.constant 0 : i32
    return %c0_i32, %c0_i32_0 : i32, i32
  }
  func.func @transform_10(%arg0: i32) -> (i32, i32) {
    %c0_i32 = arith.constant 0 : i32
    %c0_i32_0 = arith.constant 0 : i32
    %c0_i32_1 = arith.constant 0 : i32
    return %c0_i32, %c0_i32_0 : i32, i32
  }
  func.func @transform_11(%arg0: i32) -> (i32, i32) {
    %c0_i32 = arith.constant 0 : i32
    %c0_i32_0 = arith.constant 0 : i32
    %c0_i32_1 = arith.constant 0 : i32
    return %c0_i32, %c0_i32_0 : i32, i32
  }
  func.func @transform_12(%arg0: i32) -> (i32, i32) {
    %c0_i32 = arith.constant 0 : i32
    %c0_i32_0 = arith.constant 0 : i32
    %c0_i32_1 = arith.constant 0 : i32
    return %c0_i32, %c0_i32_0 : i32, i32
  }
  func.func @transform_13(%arg0: i32) -> (i32, i32) {
    %c0_i32 = arith.constant 0 : i32
    %c0_i32_0 = arith.constant 0 : i32
    %c0_i32_1 = arith.constant 0 : i32
    return %c0_i32, %c0_i32_0 : i32, i32
  }
  func.func @transform_14(%arg0: i32) -> (i32, i32) {
    %c0_i32 = arith.constant 0 : i32
    %c0_i32_0 = arith.constant 0 : i32
    %c0_i32_1 = arith.constant 0 : i32
    return %c0_i32, %c0_i32_0 : i32, i32
  }
  func.func @transform_15(%arg0: i32) -> (i32, i32) {
    %c0_i32 = arith.constant 0 : i32
    %c0_i32_0 = arith.constant 0 : i32
    %c0_i32_1 = arith.constant 0 : i32
    return %c0_i32, %c0_i32_0 : i32, i32
  }
  func.func @transform_16(%arg0: i32) -> (i32, i32, i32) {
    %c0_i32 = arith.constant 0 : i32
    %c0_i32_0 = arith.constant 0 : i32
    %c0_i32_1 = arith.constant 0 : i32
    return %arg0, %c0_i32, %c0_i32_0 : i32, i32, i32
  }
}

</mosaic_0001>

<llo_original>
// kernel: _lambda_.1
$region0: #{_lambda_.1}
  #allocation0 [shape = 'u32[]', space=smem, size = 0x4, offset = 0x4, fixed_abs, tag = 'smem constant byte address 0x4 - core index']
  #allocation1 [shape = 'u32[144,128]{1,0:T(1,128)}', space=vmem, size = 0x12000, scoped, tag = 'internal scratch']
  %s0 = inlined_call_operand.vmem [shape: f32[2,8,32], index: 0, kind: input, shape index: {}]
  %s1 = inlined_call_operand.vmem [shape: f32[8,192], index: 1, kind: input, shape index: {}]
  %s2 = inlined_call_operand.vmem [shape: f32[8,32], index: 2, kind: input, shape index: {}]
  %s3 = inlined_call_operand.vmem [shape: f32[48,8], index: 3, kind: input, shape index: {}]
  %s4 = inlined_call_operand.vmem [shape: bf16[32,32], index: 4, kind: input, shape index: {}]
  %s5 = inlined_call_operand.vmem [shape: bf16[32,32], index: 5, kind: input, shape index: {}]
  %s6 = inlined_call_operand.vmem [shape: bf16[32,192], index: 6, kind: input, shape index: {}]
  %s7 = inlined_call_operand.vmem [shape: bf16[192,32], index: 7, kind: input, shape index: {}]
  %s8 = inlined_call_operand.vmem [shape: f32[1,32], index: 8, kind: input, shape index: {}]
  %s9 = inlined_call_operand.vmem [shape: bf16[32,128], index: 9, kind: input, shape index: {}]
  %s10 = inlined_call_operand.vmem [shape: f32[1,128], index: 10, kind: input, shape index: {}]
  %s11 = inlined_call_operand.vmem [shape: bf16[128,128], index: 11, kind: input, shape index: {}]
  %s12 = inlined_call_operand.vmem [shape: bf16[128,128], index: 12, kind: input, shape index: {}]
  %s13 = inlined_call_operand.vmem [shape: bf16[128,128], index: 13, kind: input, shape index: {}]
  %s14 = inlined_call_operand.vmem [shape: bf16[128,32], index: 14, kind: input, shape index: {}]
  %s15 = inlined_call_operand.vmem [shape: f32[1,32], index: 15, kind: input, shape index: {}]
  %s16 = inlined_call_operand.hbm [shape: f32[2,8,32], index: 16, kind: output, shape index: {}]
  %s17 = sld [smem:[#allocation0]]
  $region97: #{_lambda_.1} parent=0
    _
  %s19 = ssub.s32 1, %s17
  %s20 = scalar_select 0, %s19, %s17
  $region1: #{_lambda_.1} parent=0
    #allocation2 [shape = 'u8[8192]{0}', space=vmem, size = 0x2000, scoped, tag = 'output window, operand 0']
    #allocation3 [shape = 's32[2]{0}', space=sflag, size = 0x8, scoped, tag = 'scoped memory for _lambda_.1']
    %21 = vsyncpa [#allocation3], 0
    %s22 = scalar_lea.sflag [#allocation3], 1
    %23 = vsyncpa %s22, 0
    loop: start=0, step=1, limit=4
    $region2: #{_lambda_.1} parent=1 // loop_pre_header
      _
    $region3: #{_lambda_.1} parent=1 // loop_header
      %s25 = sphi 0, %s29
      %p26 = scmp.ge.s32.totalorder %s25, 4
      %s35 = sphi 0, %s37
      %s38 = sphi 0, %s35
      %s39 = sphi 0, %s38
      %s55 = sphi 0, %s39
      %s59 = sphi 0, %s59
      %s61 = sphi 0, %s59
      %s62 = sphi 0, %s61
      %s76 = sphi 0, %s62
      %s80 = sphi 0, %s80
      %s82 = sphi 0, %s80
      %s83 = sphi 0, %s82
      %s97 = sphi 0, %s83
      %s101 = sphi 0, %s101
      %s103 = sphi 0, %s101
      %s104 = sphi 0, %s103
      %s118 = sphi 0, %s104
      %s122 = sphi 0, %s122
      %s124 = sphi 0, %s122
      %s125 = sphi 0, %s124
      %s139 = sphi 0, %s125
      %s143 = sphi 0, %s143
      %s145 = sphi 0, %s143
      %s146 = sphi 0, %s145
      %s160 = sphi 0, %s146
      %s164 = sphi 0, %s164
      %s166 = sphi 0, %s164
      %s167 = sphi 0, %s166
      %s181 = sphi 0, %s167
      %s185 = sphi 0, %s185
      %s187 = sphi 0, %s185
      %s188 = sphi 0, %s187
      %s202 = sphi 0, %s188
      %s206 = sphi 0, %s206
      %s208 = sphi 0, %s206
      %s209 = sphi 0, %s208
      %s223 = sphi 0, %s209
      %s227 = sphi 0, %s227
      %s229 = sphi 0, %s227
      %s230 = sphi 0, %s229
      %s244 = sphi 0, %s230
      %s248 = sphi 0, %s248
      %s250 = sphi 0, %s248
      %s251 = sphi 0, %s250
      %s265 = sphi 0, %s251
      %s269 = sphi 0, %s269
      %s271 = sphi 0, %s269
      %s272 = sphi 0, %s271
      %s286 = sphi 0, %s272
      %s290 = sphi 0, %s290
      %s292 = sphi 0, %s290
      %s293 = sphi 0, %s292
      %s307 = sphi 0, %s293
      %s311 = sphi 0, %s311
      %s313 = sphi 0, %s311
      %s314 = sphi 0, %s313
      %s328 = sphi 0, %s314
      %s332 = sphi 0, %s332
      %s334 = sphi 0, %s332
      %s335 = sphi 0, %s334
      %s349 = sphi 0, %s335
      %s353 = sphi 0, %s353
      %s355 = sphi 0, %s353
      %s356 = sphi 0, %s355
      %s370 = sphi 0, %s356
      %s376 = sphi 0, %s378
      %s379 = sphi 0, %s376
      %s380 = sphi 0, %s379
      %s396 = sphi 0, %s380
    $region4: #{_lambda_.1} parent=1 // loop_header_branch
      %28 = sbr.rel (%p26) target = $region8
    $region5: #{_lambda_.1} parent=1 // loop_body
      %s30 = ssub.s32 %s25, 1
      %s31 = ssub.s32 %s25, 2
      %s32 = sadd.s32 %s25, 1
      %s33 = ssub.s32 %s25, %s32
      %p34 = scmp.eq.s32.totalorder %s33, 0
      %s36 = sadd.s32 %s35, 1
      %s37 = scalar_select %p34, %s35, %s36
      %p40 = pneg %p34
      %p41 = scmp.eq.s32.totalorder %s25, 1
      %p42 = por %p40, %p41
      %p43 = scmp.ne.s32.totalorder %s35, %s38
      %p44 = scmp.eq.s32.totalorder %s25, 0
      %p45 = por %p43, %p44
      %p46 = scmp.ne.s32.totalorder %s35, %s38
      %p47 = scmp.eq.s32.totalorder %s30, 1
      %p48 = por %p46, %p47
      %p49 = scmp.ne.s32.totalorder %s38, %s39
      %p50 = scmp.eq.s32.totalorder %s30, 0
      %p51 = por %p49, %p50
      %p52 = scmp.ne.s32.totalorder %s38, %s39
      %p53 = scmp.eq.s32.totalorder %s31, 1
      %p54 = por %p52, %p53
      %p56 = scmp.ne.s32.totalorder %s39, %s55
      %p57 = scmp.eq.s32.totalorder %s31, 0
      %p58 = por %p56, %p57
      %s60 = sadd.s32 %s59, 1
      %p63 = scmp.eq.s32.totalorder %s25, 1
      %p64 = scmp.ne.s32.totalorder %s59, %s61
      %p65 = scmp.eq.s32.totalorder %s25, 0
      %p66 = por %p64, %p65
      %p67 = scmp.ne.s32.totalorder %s59, %s61
      %p68 = scmp.eq.s32.totalorder %s30, 1
      %p69 = por %p67, %p68
      %p70 = scmp.ne.s32.totalorder %s61, %s62
      %p71 = scmp.eq.s32.totalorder %s30, 0
      %p72 = por %p70, %p71
      %p73 = scmp.ne.s32.totalorder %s61, %s62
      %p74 = scmp.eq.s32.totalorder %s31, 1
      %p75 = por %p73, %p74
      %p77 = scmp.ne.s32.totalorder %s62, %s76
      %p78 = scmp.eq.s32.totalorder %s31, 0
      %p79 = por %p77, %p78
      %s81 = sadd.s32 %s80, 1
      %p84 = scmp.eq.s32.totalorder %s25, 1
      %p85 = scmp.ne.s32.totalorder %s80, %s82
      %p86 = scmp.eq.s32.totalorder %s25, 0
      %p87 = por %p85, %p86
      %p88 = scmp.ne.s32.totalorder %s80, %s82
      %p89 = scmp.eq.s32.totalorder %s30, 1
      %p90 = por %p88, %p89
      %p91 = scmp.ne.s32.totalorder %s82, %s83
      %p92 = scmp.eq.s32.totalorder %s30, 0
      %p93 = por %p91, %p92
      %p94 = scmp.ne.s32.totalorder %s82, %s83
      %p95 = scmp.eq.s32.totalorder %s31, 1
      %p96 = por %p94, %p95
      %p98 = scmp.ne.s32.totalorder %s83, %s97
      %p99 = scmp.eq.s32.totalorder %s31, 0
      %p100 = por %p98, %p99
      %s102 = sadd.s32 %s101, 1
      %p105 = scmp.eq.s32.totalorder %s25, 1
      %p106 = scmp.ne.s32.totalorder %s101, %s103
      %p107 = scmp.eq.s32.totalorder %s25, 0
      %p108 = por %p106, %p107
      %p109 = scmp.ne.s32.totalorder %s101, %s103
      %p110 = scmp.eq.s32.totalorder %s30, 1
      %p111 = por %p109, %p110
      %p112 = scmp.ne.s32.totalorder %s103, %s104
      %p113 = scmp.eq.s32.totalorder %s30, 0
      %p114 = por %p112, %p113
      %p115 = scmp.ne.s32.totalorder %s103, %s104
      %p116 = scmp.eq.s32.totalorder %s31, 1
      %p117 = por %p115, %p116
      %p119 = scmp.ne.s32.totalorder %s104, %s118
      %p120 = scmp.eq.s32.totalorder %s31, 0
      %p121 = por %p119, %p120
      %s123 = sadd.s32 %s122, 1
      %p126 = scmp.eq.s32.totalorder %s25, 1
      %p127 = scmp.ne.s32.totalorder %s122, %s124
      %p128 = scmp.eq.s32.totalorder %s25, 0
      %p129 = por %p127, %p128
      %p130 = scmp.ne.s32.totalorder %s122, %s124
      %p131 = scmp.eq.s32.totalorder %s30, 1
      %p132 = por %p130, %p131
      %p133 = scmp.ne.s32.totalorder %s124, %s125
      %p134 = scmp.eq.s32.totalorder %s30, 0
      %p135 = por %p133, %p134
      %p136 = scmp.ne.s32.totalorder %s124, %s125
      %p137 = scmp.eq.s32.totalorder %s31, 1
      %p138 = por %p136, %p137
      %p140 = scmp.ne.s32.totalorder %s125, %s139
      %p141 = scmp.eq.s32.totalorder %s31, 0
      %p142 = por %p140, %p141
      %s144 = sadd.s32 %s143, 1
      %p147 = scmp.eq.s32.totalorder %s25, 1
      %p148 = scmp.ne.s32.totalorder %s143, %s145
      %p149 = scmp.eq.s32.totalorder %s25, 0
      %p150 = por %p148, %p149
      %p151 = scmp.ne.s32.totalorder %s143, %s145
      %p152 = scmp.eq.s32.totalorder %s30, 1
      %p153 = por %p151, %p152
      %p154 = scmp.ne.s32.totalorder %s145, %s146
      %p155 = scmp.eq.s32.totalorder %s30, 0
      %p156 = por %p154, %p155
      %p157 = scmp.ne.s32.totalorder %s145, %s146
      %p158 = scmp.eq.s32.totalorder %s31, 1
      %p159 = por %p157, %p158
      %p161 = scmp.ne.s32.totalorder %s146, %s160
      %p162 = scmp.eq.s32.totalorder %s31, 0
      %p163 = por %p161, %p162
      %s165 = sadd.s32 %s164, 1
      %p168 = scmp.eq.s32.totalorder %s25, 1
      %p169 = scmp.ne.s32.totalorder %s164, %s166
      %p170 = scmp.eq.s32.totalorder %s25, 0
      %p171 = por %p169, %p170
      %p172 = scmp.ne.s32.totalorder %s164, %s166
      %p173 = scmp.eq.s32.totalorder %s30, 1
      %p174 = por %p172, %p173
      %p175 = scmp.ne.s32.totalorder %s166, %s167
      %p176 = scmp.eq.s32.totalorder %s30, 0
      %p177 = por %p175, %p176
      %p178 = scmp.ne.s32.totalorder %s166, %s167
      %p179 = scmp.eq.s32.totalorder %s31, 1
      %p180 = por %p178, %p179
      %p182 = scmp.ne.s32.totalorder %s167, %s181
      %p183 = scmp.eq.s32.totalorder %s31, 0
      %p184 = por %p182, %p183
      %s186 = sadd.s32 %s185, 1
      %p189 = scmp.eq.s32.totalorder %s25, 1
      %p190 = scmp.ne.s32.totalorder %s185, %s187
      %p191 = scmp.eq.s32.totalorder %s25, 0
      %p192 = por %p190, %p191
      %p193 = scmp.ne.s32.totalorder %s185, %s187
      %p194 = scmp.eq.s32.totalorder %s30, 1
      %p195 = por %p193, %p194
      %p196 = scmp.ne.s32.totalorder %s187, %s188
      %p197 = scmp.eq.s32.totalorder %s30, 0
      %p198 = por %p196, %p197
      %p199 = scmp.ne.s32.totalorder %s187, %s188
      %p200 = scmp.eq.s32.totalorder %s31, 1
      %p201 = por %p199, %p200
      %p203 = scmp.ne.s32.totalorder %s188, %s202
      %p204 = scmp.eq.s32.totalorder %s31, 0
      %p205 = por %p203, %p204
      %s207 = sadd.s32 %s206, 1
      %p210 = scmp.eq.s32.totalorder %s25, 1
      %p211 = scmp.ne.s32.totalorder %s206, %s208
      %p212 = scmp.eq.s32.totalorder %s25, 0
      %p213 = por %p211, %p212
      %p214 = scmp.ne.s32.totalorder %s206, %s208
      %p215 = scmp.eq.s32.totalorder %s30, 1
      %p216 = por %p214, %p215
      %p217 = scmp.ne.s32.totalorder %s208, %s209
      %p218 = scmp.eq.s32.totalorder %s30, 0
      %p219 = por %p217, %p218
      %p220 = scmp.ne.s32.totalorder %s208, %s209
      %p221 = scmp.eq.s32.totalorder %s31, 1
      %p222 = por %p220, %p221
      %p224 = scmp.ne.s32.totalorder %s209, %s223
      %p225 = scmp.eq.s32.totalorder %s31, 0
      %p226 = por %p224, %p225
      %s228 = sadd.s32 %s227, 1
      %p231 = scmp.eq.s32.totalorder %s25, 1
      %p232 = scmp.ne.s32.totalorder %s227, %s229
      %p233 = scmp.eq.s32.totalorder %s25, 0
      %p234 = por %p232, %p233
      %p235 = scmp.ne.s32.totalorder %s227, %s229
      %p236 = scmp.eq.s32.totalorder %s30, 1
      %p237 = por %p235, %p236
      %p238 = scmp.ne.s32.totalorder %s229, %s230
      %p239 = scmp.eq.s32.totalorder %s30, 0
      %p240 = por %p238, %p239
      %p241 = scmp.ne.s32.totalorder %s229, %s230
      %p242 = scmp.eq.s32.totalorder %s31, 1
      %p243 = por %p241, %p242
      %p245 = scmp.ne.s32.totalorder %s230, %s244
      %p246 = scmp.eq.s32.totalorder %s31, 0
      %p247 = por %p245, %p246
      %s249 = sadd.s32 %s248, 1
      %p252 = scmp.eq.s32.totalorder %s25, 1
      %p253 = scmp.ne.s32.totalorder %s248, %s250
      %p254 = scmp.eq.s32.totalorder %s25, 0
      %p255 = por %p253, %p254
      %p256 = scmp.ne.s32.totalorder %s248, %s250
      %p257 = scmp.eq.s32.totalorder %s30, 1
      %p258 = por %p256, %p257
      %p259 = scmp.ne.s32.totalorder %s250, %s251
      %p260 = scmp.eq.s32.totalorder %s30, 0
      %p261 = por %p259, %p260
      %p262 = scmp.ne.s32.totalorder %s250, %s251
      %p263 = scmp.eq.s32.totalorder %s31, 1
      %p264 = por %p262, %p263
      %p266 = scmp.ne.s32.totalorder %s251, %s265
      %p267 = scmp.eq.s32.totalorder %s31, 0
      %p268 = por %p266, %p267
      %s270 = sadd.s32 %s269, 1
      %p273 = scmp.eq.s32.totalorder %s25, 1
      %p274 = scmp.ne.s32.totalorder %s269, %s271
      %p275 = scmp.eq.s32.totalorder %s25, 0
      %p276 = por %p274, %p275
      %p277 = scmp.ne.s32.totalorder %s269, %s271
      %p278 = scmp.eq.s32.totalorder %s30, 1
      %p279 = por %p277, %p278
      %p280 = scmp.ne.s32.totalorder %s271, %s272
      %p281 = scmp.eq.s32.totalorder %s30, 0
      %p282 = por %p280, %p281
      %p283 = scmp.ne.s32.totalorder %s271, %s272
      %p284 = scmp.eq.s32.totalorder %s31, 1
      %p285 = por %p283, %p284
      %p287 = scmp.ne.s32.totalorder %s272, %s286
      %p288 = scmp.eq.s32.totalorder %s31, 0
      %p289 = por %p287, %p288
      %s291 = sadd.s32 %s290, 1
      %p294 = scmp.eq.s32.totalorder %s25, 1
      %p295 = scmp.ne.s32.totalorder %s290, %s292
      %p296 = scmp.eq.s32.totalorder %s25, 0
      %p297 = por %p295, %p296
      %p298 = scmp.ne.s32.totalorder %s290, %s292
      %p299 = scmp.eq.s32.totalorder %s30, 1
      %p300 = por %p298, %p299
      %p301 = scmp.ne.s32.totalorder %s292, %s293
      %p302 = scmp.eq.s32.totalorder %s30, 0
      %p303 = por %p301, %p302
      %p304 = scmp.ne.s32.totalorder %s292, %s293
      %p305 = scmp.eq.s32.totalorder %s31, 1
      %p306 = por %p304, %p305
      %p308 = scmp.ne.s32.totalorder %s293, %s307
      %p309 = scmp.eq.s32.totalorder %s31, 0
      %p310 = por %p308, %p309
      %s312 = sadd.s32 %s311, 1
      %p315 = scmp.eq.s32.totalorder %s25, 1
      %p316 = scmp.ne.s32.totalorder %s311, %s313
      %p317 = scmp.eq.s32.totalorder %s25, 0
      %p318 = por %p316, %p317
      %p319 = scmp.ne.s32.totalorder %s311, %s313
      %p320 = scmp.eq.s32.totalorder %s30, 1
      %p321 = por %p319, %p320
      %p322 = scmp.ne.s32.totalorder %s313, %s314
      %p323 = scmp.eq.s32.totalorder %s30, 0
      %p324 = por %p322, %p323
      %p325 = scmp.ne.s32.totalorder %s313, %s314
      %p326 = scmp.eq.s32.totalorder %s31, 1
      %p327 = por %p325, %p326
      %p329 = scmp.ne.s32.totalorder %s314, %s328
      %p330 = scmp.eq.s32.totalorder %s31, 0
      %p331 = por %p329, %p330
      %s333 = sadd.s32 %s332, 1
      %p336 = scmp.eq.s32.totalorder %s25, 1
      %p337 = scmp.ne.s32.totalorder %s332, %s334
      %p338 = scmp.eq.s32.totalorder %s25, 0
      %p339 = por %p337, %p338
      %p340 = scmp.ne.s32.totalorder %s332, %s334
      %p341 = scmp.eq.s32.totalorder %s30, 1
      %p342 = por %p340, %p341
      %p343 = scmp.ne.s32.totalorder %s334, %s335
      %p344 = scmp.eq.s32.totalorder %s30, 0
      %p345 = por %p343, %p344
      %p346 = scmp.ne.s32.totalorder %s334, %s335
      %p347 = scmp.eq.s32.totalorder %s31, 1
      %p348 = por %p346, %p347
      %p350 = scmp.ne.s32.totalorder %s335, %s349
      %p351 = scmp.eq.s32.totalorder %s31, 0
      %p352 = por %p350, %p351
      %s354 = sadd.s32 %s353, 1
      %p357 = scmp.eq.s32.totalorder %s25, 1
      %p358 = scmp.ne.s32.totalorder %s353, %s355
      %p359 = scmp.eq.s32.totalorder %s25, 0
      %p360 = por %p358, %p359
      %p361 = scmp.ne.s32.totalorder %s353, %s355
      %p362 = scmp.eq.s32.totalorder %s30, 1
      %p363 = por %p361, %p362
      %p364 = scmp.ne.s32.totalorder %s355, %s356
      %p365 = scmp.eq.s32.totalorder %s30, 0
      %p366 = por %p364, %p365
      %p367 = scmp.ne.s32.totalorder %s355, %s356
      %p368 = scmp.eq.s32.totalorder %s31, 1
      %p369 = por %p367, %p368
      %p371 = scmp.ne.s32.totalorder %s356, %s370
      %p372 = scmp.eq.s32.totalorder %s31, 0
      %p373 = por %p371, %p372
      %s374 = ssub.s32 %s25, %s32
      %p375 = scmp.eq.s32.totalorder %s374, 0
      %s377 = sadd.s32 %s376, 1
      %s378 = scalar_select %p375, %s376, %s377
      %p381 = pneg %p375
      %p382 = scmp.eq.s32.totalorder %s25, 1
      %p383 = por %p381, %p382
      %p384 = scmp.ne.s32.totalorder %s376, %s379
      %p385 = scmp.eq.s32.totalorder %s25, 0
      %p386 = por %p384, %p385
      %p387 = scmp.ne.s32.totalorder %s376, %s379
      %p388 = scmp.eq.s32.totalorder %s30, 1
      %p389 = por %p387, %p388
      %p390 = scmp.ne.s32.totalorder %s379, %s380
      %p391 = scmp.eq.s32.totalorder %s30, 0
      %p392 = por %p390, %p391
      %p393 = scmp.ne.s32.totalorder %s379, %s380
      %p394 = scmp.eq.s32.totalorder %s31, 1
      %p395 = por %p393, %p394
      %p397 = scmp.ne.s32.totalorder %s380, %s396
      %p398 = scmp.eq.s32.totalorder %s31, 0
      %p399 = por %p397, %p398
      %p400 = scmp.le.s32.totalorder 1, %s25
      %p401 = scmp.lt.s32.totalorder %s25, 3
      %p402 = pnand %p400, %p401
      %p403 = pneg %p402
      // Predicated region
      $region9: #{_lambda_.1} parent=5 // pred_check
        _
      $region10: #{_lambda_.1} parent=5 // pred_check_branch
        %405 = sbr.rel (%p402) target = $region12
      $region11: #{_lambda_.1} parent=5 // pred_region
        %s406 = ssub.s32 %s25, 1
        // Predicated region
        $region13: #{_lambda_.1} parent=11 // pred_check
          %p407 = pneg %p72
        $region14: #{_lambda_.1} parent=11 // pred_check_branch
          %409 = sbr.rel (%p407) target = $region16
        $region15: #{_lambda_.1} parent=11 // pred_region
          _
        $region16: #{_lambda_.1} parent=11 // pred_fallthru
          _
        // Predicated region
        $region17: #{_lambda_.1} parent=11 // pred_check
          %p410 = pneg %p93
        $region18: #{_lambda_.1} parent=11 // pred_check_branch
          %412 = sbr.rel (%p410) target = $region20
        $region19: #{_lambda_.1} parent=11 // pred_region
          _
        $region20: #{_lambda_.1} parent=11 // pred_fallthru
          _
        // Predicated region
        $region21: #{_lambda_.1} parent=11 // pred_check
          %p413 = pneg %p114
        $region22: #{_lambda_.1} parent=11 // pred_check_branch
          %415 = sbr.rel (%p413) target = $region24
        $region23: #{_lambda_.1} parent=11 // pred_region
          _
        $region24: #{_lambda_.1} parent=11 // pred_fallthru
          _
        // Predicated region
        $region25: #{_lambda_.1} parent=11 // pred_check
          %p416 = pneg %p135
        $region26: #{_lambda_.1} parent=11 // pred_check_branch
          %418 = sbr.rel (%p416) target = $region28
        $region27: #{_lambda_.1} parent=11 // pred_region
          _
        $region28: #{_lambda_.1} parent=11 // pred_fallthru
          _
        // Predicated region
        $region29: #{_lambda_.1} parent=11 // pred_check
          %p419 = pneg %p156
        $region30: #{_lambda_.1} parent=11 // pred_check_branch
          %421 = sbr.rel (%p419) target = $region32
        $region31: #{_lambda_.1} parent=11 // pred_region
          _
        $region32: #{_lambda_.1} parent=11 // pred_fallthru
          _
        // Predicated region
        $region33: #{_lambda_.1} parent=11 // pred_check
          %p422 = pneg %p177
        $region34: #{_lambda_.1} parent=11 // pred_check_branch
          %424 = sbr.rel (%p422) target = $region36
        $region35: #{_lambda_.1} parent=11 // pred_region
          _
        $region36: #{_lambda_.1} parent=11 // pred_fallthru
          _
        // Predicated region
        $region37: #{_lambda_.1} parent=11 // pred_check
          %p425 = pneg %p198
        $region38: #{_lambda_.1} parent=11 // pred_check_branch
          %427 = sbr.rel (%p425) target = $region40
        $region39: #{_lambda_.1} parent=11 // pred_region
          _
        $region40: #{_lambda_.1} parent=11 // pred_fallthru
          _
        // Predicated region
        $region41: #{_lambda_.1} parent=11 // pred_check
          %p428 = pneg %p219
        $region42: #{_lambda_.1} parent=11 // pred_check_branch
          %430 = sbr.rel (%p428) target = $region44
        $region43: #{_lambda_.1} parent=11 // pred_region
          _
        $region44: #{_lambda_.1} parent=11 // pred_fallthru
          _
        // Predicated region
        $region45: #{_lambda_.1} parent=11 // pred_check
          %p431 = pneg %p240
        $region46: #{_lambda_.1} parent=11 // pred_check_branch
          %433 = sbr.rel (%p431) target = $region48
        $region47: #{_lambda_.1} parent=11 // pred_region
          _
        $region48: #{_lambda_.1} parent=11 // pred_fallthru
          _
        // Predicated region
        $region49: #{_lambda_.1} parent=11 // pred_check
          %p434 = pneg %p261
        $region50: #{_lambda_.1} parent=11 // pred_check_branch
          %436 = sbr.rel (%p434) target = $region52
        $region51: #{_lambda_.1} parent=11 // pred_region
          _
        $region52: #{_lambda_.1} parent=11 // pred_fallthru
          _
        // Predicated region
        $region53: #{_lambda_.1} parent=11 // pred_check
          %p437 = pneg %p282
        $region54: #{_lambda_.1} parent=11 // pred_check_branch
          %439 = sbr.rel (%p437) target = $region56
        $region55: #{_lambda_.1} parent=11 // pred_region
          _
        $region56: #{_lambda_.1} parent=11 // pred_fallthru
          _
        // Predicated region
        $region57: #{_lambda_.1} parent=11 // pred_check
          %p440 = pneg %p303
        $region58: #{_lambda_.1} parent=11 // pred_check_branch
          %442 = sbr.rel (%p440) target = $region60
        $region59: #{_lambda_.1} parent=11 // pred_region
          _
        $region60: #{_lambda_.1} parent=11 // pred_fallthru
          _
        // Predicated region
        $region61: #{_lambda_.1} parent=11 // pred_check
          %p443 = pneg %p324
        $region62: #{_lambda_.1} parent=11 // pred_check_branch
          %445 = sbr.rel (%p443) target = $region64
        $region63: #{_lambda_.1} parent=11 // pred_region
          _
        $region64: #{_lambda_.1} parent=11 // pred_fallthru
          _
        // Predicated region
        $region65: #{_lambda_.1} parent=11 // pred_check
          %p446 = pneg %p345
        $region66: #{_lambda_.1} parent=11 // pred_check_branch
          %448 = sbr.rel (%p446) target = $region68
        $region67: #{_lambda_.1} parent=11 // pred_region
          _
        $region68: #{_lambda_.1} parent=11 // pred_fallthru
          _
        // Predicated region
        $region69: #{_lambda_.1} parent=11 // pred_check
          %p449 = pneg %p366
        $region70: #{_lambda_.1} parent=11 // pred_check_branch
          %451 = sbr.rel (%p449) target = $region72
        $region71: #{_lambda_.1} parent=11 // pred_region
          _
        $region72: #{_lambda_.1} parent=11 // pred_fallthru
          _
      $region12: #{_lambda_.1} parent=5 // pred_fallthru
        _
      %p452 = scmp.lt.s32.totalorder %s25, 2
      // Predicated region
      $region73: #{_lambda_.1} parent=5 // pred_check
        %p453 = pneg %p452
      $region74: #{_lambda_.1} parent=5 // pred_check_branch
        %455 = sbr.rel (%p453) target = $region76
      $region75: #{_lambda_.1} parent=5 // pred_region
        // Predicated region
        $region77: #{_lambda_.1} parent=75 // pred_check
          %p456 = pneg %p45
        $region78: #{_lambda_.1} parent=75 // pred_check_branch
          %458 = sbr.rel (%p456) target = $region80
        $region79: #{_lambda_.1} parent=75 // pred_region
          %p459 = scmp.lt.s32.totalorder %s25, 1
          %s460 = scalar_select %p459, %s25, 1
          %s461 = smul.addr %s460, 8
          %s462 = scalar_lea.vmem %s0, %s461
        $region80: #{_lambda_.1} parent=75 // pred_fallthru
          _
      $region76: #{_lambda_.1} parent=5 // pred_fallthru
        _
      %p463 = scmp.le.s32.totalorder 1, %s25
      %p464 = scmp.lt.s32.totalorder %s25, 3
      %p465 = pnand %p463, %p464
      %p466 = pneg %p465
      // Predicated region
      $region81: #{_lambda_.1} parent=5 // pred_check
        _
      $region82: #{_lambda_.1} parent=5 // pred_check_branch
        %468 = sbr.rel (%p465) target = $region84
      $region83: #{_lambda_.1} parent=5 // pred_region
        %s469 = ssub.s32 %s25, 1
        %p470 = scmp.lt.s32.totalorder %s30, 1
        %s471 = scalar_select %p470, %s30, 1
        %s472 = smul.addr %s471, 8
        %s473 = scalar_lea.vmem %s0, %s472
        %p474 = pneg %p51
        %p475 = pneg %p48
        %p476 = pneg %p72
        %p477 = pneg %p69
        %p478 = pneg %p93
        %p479 = pneg %p90
        %p480 = pneg %p114
        %p481 = pneg %p111
        %p482 = pneg %p135
        %p483 = pneg %p132
        %p484 = pneg %p156
        %p485 = pneg %p153
        %p486 = pneg %p177
        %p487 = pneg %p174
        %p488 = pneg %p198
        %p489 = pneg %p195
        %p490 = pneg %p219
        %p491 = pneg %p216
        %p492 = pneg %p240
        %p493 = pneg %p237
        %p494 = pneg %p261
        %p495 = pneg %p258
        %p496 = pneg %p282
        %p497 = pneg %p279
        %p498 = pneg %p303
        %p499 = pneg %p300
        %p500 = pneg %p324
        %p501 = pneg %p321
        %p502 = pneg %p345
        %p503 = pneg %p342
        %p504 = pneg %p366
        %p505 = pneg %p363
        %p506 = pneg %p392
        %p507 = pneg %p389
        %s508 = sand.u32 %s379, 1
        %s509 = scalar_lea.sflag [#allocation3], %s508
        %s510 = sand.u32 %s379, 1
        %s511 = smul.addr %s510, 8
        %s512 = scalar_lea.vmem [#allocation2], %s511
        %p513 = scmp.lt.s32.totalorder %s30, 1
        %s514 = scalar_select %p513, %s30, 1
        %s515 = smul.addr %s514, 8
        %s516 = scalar_lea.vmem %s0, %s515
        %v518 = vld [vmem:[%s516] sm:$0xff]
        %v519 = vld [vmem:[%s5] sm:$0xf]
        %v520 = vld [vmem:[%s5 + $0x4] sm:$0xf]
        %v521 = vld [vmem:[%s5 + $0x8] sm:$0xf]
        %v522 = vld [vmem:[%s5 + $0xc] sm:$0xf]
        %v523 = vpack.c.bf16 %v518, %v518
        %v528 = vunpack.c.l.b16 %v519
        %v529 = vunpack.c.l.b16 %v520
        %v530 = vunpack.c.l.b16 %v521
        %v531 = vunpack.c.l.b16 %v522
        %v532 = vpack.c.b16 %v529, %v528
        %v533 = vpack.c.b16 %v531, %v530
        %vm536 = vcmask 261120
        %v538 = vsel %vm536, %v523, 0
        %540 = vmatprep.subr.bf16.mxu0 0
        %541 = vmatpush1.bf16.msra.mxu0 %v532
        %542 = vmatprep.subr.bf16.mxu0 0
        %543 = vmatpush1.bf16.msra.mxu0 %v533
        %544 = vmatprep.subr.bf16.mxu0 0
        %545 = vmatpush1.bf16.msra.mxu0 0
        %546 = vmatprep.subr.bf16.mxu0 0
        %547 = vmatpush1.bf16.msra.mxu0 0
        %548 = vmatprep.subr.bf16.mxu0 0
        %549 = vmatpush1.bf16.msra.mxu0 0
        %550 = vmatprep.subr.bf16.mxu0 0
        %551 = vmatpush1.bf16.msra.mxu0 0
        %552 = vmatprep.subr.bf16.mxu0 0
        %553 = vmatpush1.bf16.msra.mxu0 0
        %554 = vmatprep.subr.bf16.mxu0 0
        %555 = vmatpush1.bf16.msra.mxu0 0
        %556 = vmatprep.subr.bf16.mxu0 0
        %557 = vmatpush1.bf16.msra.mxu0 0
        %558 = vmatprep.subr.bf16.mxu0 0
        %559 = vmatpush1.bf16.msra.mxu0 0
        %560 = vmatprep.subr.bf16.mxu0 0
        %561 = vmatpush1.bf16.msra.mxu0 0
        %562 = vmatprep.subr.bf16.mxu0 0
        %563 = vmatpush1.bf16.msra.mxu0 0
        %564 = vmatprep.subr.bf16.mxu0 0
        %565 = vmatpush1.bf16.msra.mxu0 0
        %566 = vmatprep.subr.bf16.mxu0 0
        %567 = vmatpush1.bf16.msra.mxu0 0
        %568 = vmatprep.subr.bf16.mxu0 0
        %569 = vmatpush1.bf16.msra.mxu0 0
        %570 = vmatprep.subr.bf16.mxu0 0
        %571 = vmatpush1.bf16.msra.mxu0 0
        %572 = vmatprep.mubr.bf16.mxu0 0
        %573 = vmatmul.mubr.bf16.gmra.mrb[0].mxu0 %v538
        %v574 = vpop.f32.mrb[0].mxu0
        %v575 = vadd.f32 0.0, %v574
        %v576 = vpop.f32.mrb[0].mxu0
        %v577 = vpop.f32.mrb[0].mxu0
        %v578 = vpop.f32.mrb[0].mxu0
        %579 = vdwg.mxu0
        %v580 = vld [vmem:[%s1] sm:$0xff]
        %v581 = vld [vmem:[%s1 + $0x8] sm:$0xff]
        %v582 = vld [vmem:[%s6] sm:$0xff]
        %v583 = vld [vmem:[%s6 + $0x8] sm:$0xff]
        %v584 = vld [vmem:[%s6 + $0x10] sm:$0xff]
        %v585 = vld [vmem:[%s6 + $0x18] sm:$0xff]
        %v590 = vunpack.c.l.b16 %v582
        %v591 = vunpack.c.h.b16 %v582
        %v592 = vunpack.c.l.b16 %v583
        %v593 = vunpack.c.h.b16 %v583
        %v594 = vunpack.c.l.b16 %v584
        %v595 = vunpack.c.h.b16 %v584
        %v596 = vunpack.c.l.b16 %v585
        %v597 = vunpack.c.h.b16 %v585
        %v598 = vpack.c.b16 %v592, %v590
        %v599 = vpack.c.b16 %v593, %v591
        %v600 = vpack.c.b16 %v596, %v594
        %v601 = vpack.c.b16 %v597, %v595
        %606 = vmatprep.subr.bf16.mxu0 %v599
        %607 = vmatpush1.bf16.msra.mxu0 %v598
        %608 = vmatprep.subr.bf16.mxu0 %v601
        %609 = vmatpush1.bf16.msra.mxu0 %v600
        %610 = vmatprep.subr.bf16.mxu0 0
        %611 = vmatpush1.bf16.msra.mxu0 0
        %612 = vmatprep.subr.bf16.mxu0 0
        %613 = vmatpush1.bf16.msra.mxu0 0
        %614 = vmatprep.subr.bf16.mxu0 0
        %615 = vmatpush1.bf16.msra.mxu0 0
        %616 = vmatprep.subr.bf16.mxu0 0
        %617 = vmatpush1.bf16.msra.mxu0 0
        %618 = vmatprep.subr.bf16.mxu0 0
        %619 = vmatpush1.bf16.msra.mxu0 0
        %620 = vmatprep.subr.bf16.mxu0 0
        %621 = vmatpush1.bf16.msra.mxu0 0
        %622 = vmatprep.subr.bf16.mxu0 0
        %623 = vmatpush1.bf16.msra.mxu0 0
        %624 = vmatprep.subr.bf16.mxu0 0
        %625 = vmatpush1.bf16.msra.mxu0 0
        %626 = vmatprep.subr.bf16.mxu0 0
        %627 = vmatpush1.bf16.msra.mxu0 0
        %628 = vmatprep.subr.bf16.mxu0 0
        %629 = vmatpush1.bf16.msra.mxu0 0
        %630 = vmatprep.subr.bf16.mxu0 0
        %631 = vmatpush1.bf16.msra.mxu0 0
        %632 = vmatprep.subr.bf16.mxu0 0
        %633 = vmatpush1.bf16.msra.mxu0 0
        %634 = vmatprep.subr.bf16.mxu0 0
        %635 = vmatpush1.bf16.msra.mxu0 0
        %636 = vmatprep.subr.bf16.mxu0 0
        %637 = vmatpush1.bf16.msra.mxu0 0
        %638 = vmatprep.mubr.bf16.mxu0 0
        %639 = vmatmul.mubr.bf16.gmra.mrb[0].mxu0 %v538
        %v640 = vpop.f32.mrb[0].mxu0
        %v641 = vadd.f32 0.0, %v640
        %v642 = vpop.f32.mrb[0].mxu0
        %v643 = vadd.f32 0.0, %v642
        %v644 = vpop.f32.mrb[0].mxu0
        %v645 = vpop.f32.mrb[0].mxu0
        %646 = vdwg.mxu0
        %v647 = vmul.f32 %v580, %v641
        %v648 = vmul.f32 %v581, %v643
        %v649 = vld [vmem:[%s2] sm:$0xff]
        %v650 = vld [vmem:[%s4] sm:$0xf]
        %v651 = vld [vmem:[%s4 + $0x4] sm:$0xf]
        %v652 = vld [vmem:[%s4 + $0x8] sm:$0xf]
        %v653 = vld [vmem:[%s4 + $0xc] sm:$0xf]
        %v658 = vunpack.c.l.b16 %v650
        %v659 = vunpack.c.l.b16 %v651
        %v660 = vunpack.c.l.b16 %v652
        %v661 = vunpack.c.l.b16 %v653
        %v662 = vpack.c.b16 %v659, %v658
        %v663 = vpack.c.b16 %v661, %v660
        %666 = vmatprep.subr.bf16.mxu0 0
        %667 = vmatpush1.bf16.msra.mxu0 %v662
        %668 = vmatprep.subr.bf16.mxu0 0
        %669 = vmatpush1.bf16.msra.mxu0 %v663
        %670 = vmatprep.subr.bf16.mxu0 0
        %671 = vmatpush1.bf16.msra.mxu0 0
        %672 = vmatprep.subr.bf16.mxu0 0
        %673 = vmatpush1.bf16.msra.mxu0 0
        %674 = vmatprep.subr.bf16.mxu0 0
        %675 = vmatpush1.bf16.msra.mxu0 0
        %676 = vmatprep.subr.bf16.mxu0 0
        %677 = vmatpush1.bf16.msra.mxu0 0
        %678 = vmatprep.subr.bf16.mxu0 0
        %679 = vmatpush1.bf16.msra.mxu0 0
        %680 = vmatprep.subr.bf16.mxu0 0
        %681 = vmatpush1.bf16.msra.mxu0 0
        %682 = vmatprep.subr.bf16.mxu0 0
        %683 = vmatpush1.bf16.msra.mxu0 0
        %684 = vmatprep.subr.bf16.mxu0 0
        %685 = vmatpush1.bf16.msra.mxu0 0
        %686 = vmatprep.subr.bf16.mxu0 0
        %687 = vmatpush1.bf16.msra.mxu0 0
        %688 = vmatprep.subr.bf16.mxu0 0
        %689 = vmatpush1.bf16.msra.mxu0 0
        %690 = vmatprep.subr.bf16.mxu0 0
        %691 = vmatpush1.bf16.msra.mxu0 0
        %692 = vmatprep.subr.bf16.mxu0 0
        %693 = vmatpush1.bf16.msra.mxu0 0
        %694 = vmatprep.subr.bf16.mxu0 0
        %695 = vmatpush1.bf16.msra.mxu0 0
        %696 = vmatprep.subr.bf16.mxu0 0
        %697 = vmatpush1.bf16.msra.mxu0 0
        %698 = vmatprep.mubr.bf16.mxu0 0
        %699 = vmatmul.mubr.bf16.gmra.mrb[0].mxu0 %v538
        %v700 = vpop.f32.mrb[0].mxu0
        %v701 = vadd.f32 0.0, %v700
        %v702 = vpop.f32.mrb[0].mxu0
        %v703 = vpop.f32.mrb[0].mxu0
        %v704 = vpop.f32.mrb[0].mxu0
        %705 = vdwg.mxu0
        %v706 = vmul.f32 %v649, %v701
        %708 = vrot.lane.b32.xlu0 %v647, 96
        %v709 = vpop.permute.xlu0 %708
        %711 = vrot.lane.b32.xlu0 %v647, 64
        %v712 = vpop.permute.xlu0 %711
        %714 = vrot.lane.b32.xlu0 %v647, 32
        %v715 = vpop.permute.xlu0 %714
        %718 = vrot.lane.b32.xlu0 %v648, 96
        %v719 = vpop.permute.xlu0 %718
        %v721 = vpack.c.bf16 %v709, %v647
        %v722 = vpack.c.bf16 %v715, %v712
        %v723 = vpack.c.bf16 %v719, %v648
        %v724 = vpack.c.bf16 %v706, %v706
        %v725 = vld [vmem:[%s3] sm:$0xff]
        %v726 = vld [vmem:[%s3 + $0x8] sm:$0xff]
        %v727 = vld [vmem:[%s3 + $0x10] sm:$0xff]
        %v728 = vld [vmem:[%s3 + $0x18] sm:$0xff]
        %v729 = vld [vmem:[%s3 + $0x20] sm:$0xff]
        %v730 = vld [vmem:[%s3 + $0x28] sm:$0xff]
        %v732 = vsel %vm536, %v721, 0
        %v735 = vsel %vm536, %v722, 0
        %v738 = vsel %vm536, %v723, 0
        %v741 = vsel %vm536, %v724, 0
        %743 = vmatprep.subr.bf16.mxu0 0
        %744 = vmatpush1.bf16.xpose.msra.mxu0 %v741
        %745 = vmatprep.subr.bf16.mxu0 0
        %746 = vmatpush1.bf16.xpose.msra.mxu0 0
        %747 = vmatprep.subr.bf16.mxu0 0
        %748 = vmatpush1.bf16.xpose.msra.mxu0 0
        %749 = vmatprep.subr.bf16.mxu0 0
        %750 = vmatpush1.bf16.xpose.msra.mxu0 0
        %751 = vmatprep.subr.bf16.mxu0 0
        %752 = vmatpush1.bf16.xpose.msra.mxu0 0
        %753 = vmatprep.subr.bf16.mxu0 0
        %754 = vmatpush1.bf16.xpose.msra.mxu0 0
        %755 = vmatprep.subr.bf16.mxu0 0
        %756 = vmatpush1.bf16.xpose.msra.mxu0 0
        %757 = vmatprep.subr.bf16.mxu0 0
        %758 = vmatpush1.bf16.xpose.msra.mxu0 0
        %759 = vmatprep.subr.bf16.mxu0 0
        %760 = vmatpush1.bf16.xpose.msra.mxu0 0
        %761 = vmatprep.subr.bf16.mxu0 0
        %762 = vmatpush1.bf16.xpose.msra.mxu0 0
        %763 = vmatprep.subr.bf16.mxu0 0
        %764 = vmatpush1.bf16.xpose.msra.mxu0 0
        %765 = vmatprep.subr.bf16.mxu0 0
        %766 = vmatpush1.bf16.xpose.msra.mxu0 0
        %767 = vmatprep.subr.bf16.mxu0 0
        %768 = vmatpush1.bf16.xpose.msra.mxu0 0
        %769 = vmatprep.subr.bf16.mxu0 0
        %770 = vmatpush1.bf16.xpose.msra.mxu0 0
        %771 = vmatprep.subr.bf16.mxu0 0
        %772 = vmatpush1.bf16.xpose.msra.mxu0 0
        %773 = vmatprep.subr.bf16.mxu0 0
        %774 = vmatpush1.bf16.xpose.msra.mxu0 0
        %775 = vmatprep.mubr.bf16.mxu0 0
        %776 = vmatmul.mubr.bf16.gmra.mrb[0].mxu0 %v732
        %v777 = vpop.f32.mrb[0].mxu0
        %v778 = vadd.f32 %v725, %v777
        %v779 = vpop.f32.mrb[0].mxu0
        %v780 = vpop.f32.mrb[0].mxu0
        %v781 = vadd.f32 %v726, %v780
        %v782 = vpop.f32.mrb[0].mxu0
        %783 = vmatprep.mubr.bf16.mxu0 0
        %784 = vmatmul.mubr.bf16.gmra.mrb[0].mxu0 %v735
        %v785 = vpop.f32.mrb[0].mxu0
        %v786 = vadd.f32 %v727, %v785
        %v787 = vpop.f32.mrb[0].mxu0
        %v788 = vpop.f32.mrb[0].mxu0
        %v789 = vadd.f32 %v728, %v788
        %v790 = vpop.f32.mrb[0].mxu0
        %791 = vmatprep.mubr.bf16.mxu0 0
        %792 = vmatmul.mubr.bf16.gmra.mrb[0].mxu0 %v738
        %v793 = vpop.f32.mrb[0].mxu0
        %v794 = vadd.f32 %v729, %v793
        %v795 = vpop.f32.mrb[0].mxu0
        %v796 = vpop.f32.mrb[0].mxu0
        %v797 = vadd.f32 %v730, %v796
        %v798 = vpop.f32.mrb[0].mxu0
        %799 = vdwg.mxu0
        %vm800 = vcmask 64512
        %v801 = vsel %vm800, %v778, -inf
        %802 = vmax.xlane.f32.xlu0 %v801
        %v803 = vpop.xlane.xlu0 %802
        %v804 = vsel %vm800, %v781, -inf
        %805 = vmax.xlane.f32.xlu0 %v804
        %v806 = vpop.xlane.xlu0 %805
        %v807 = vsel %vm800, %v786, -inf
        %808 = vmax.xlane.f32.xlu0 %v807
        %v809 = vpop.xlane.xlu0 %808
        %v810 = vsel %vm800, %v789, -inf
        %811 = vmax.xlane.f32.xlu0 %v810
        %v812 = vpop.xlane.xlu0 %811
        %v813 = vsel %vm800, %v794, -inf
        %814 = vmax.xlane.f32.xlu0 %v813
        %v815 = vpop.xlane.xlu0 %814
        %v816 = vsel %vm800, %v797, -inf
        %817 = vmax.xlane.f32.xlu0 %v816
        %v818 = vpop.xlane.xlu0 %817
        %v819 = vsub.f32 %v778, %v803
        %v820 = vsub.f32 %v781, %v806
        %v821 = vsub.f32 %v786, %v809
        %v822 = vsub.f32 %v789, %v812
        %v823 = vsub.f32 %v794, %v815
        %v824 = vsub.f32 %v797, %v818
        %v825 = vmul.f32 %v819, 1.442695
        %v826 = vpow.pop %v825
        %v827 = vmul.f32 %v820, 1.442695
        %v828 = vpow.pop %v827
        %v829 = vmul.f32 %v821, 1.442695
        %v830 = vpow.pop %v829
        %v831 = vmul.f32 %v822, 1.442695
        %v832 = vpow.pop %v831
        %v833 = vmul.f32 %v823, 1.442695
        %v834 = vpow.pop %v833
        %v835 = vmul.f32 %v824, 1.442695
        %v836 = vpow.pop %v835
        %v837 = vsel %vm800, %v826, 0.0
        %838 = vadd.xlane.f32.xlu0 %v837
        %v839 = vpop.xlane.xlu0 %838
        %v840 = vsel %vm800, %v828, 0.0
        %841 = vadd.xlane.f32.xlu0 %v840
        %v842 = vpop.xlane.xlu0 %841
        %v843 = vsel %vm800, %v830, 0.0
        %844 = vadd.xlane.f32.xlu0 %v843
        %v845 = vpop.xlane.xlu0 %844
        %v846 = vsel %vm800, %v832, 0.0
        %847 = vadd.xlane.f32.xlu0 %v846
        %v848 = vpop.xlane.xlu0 %847
        %v849 = vsel %vm800, %v834, 0.0
        %850 = vadd.xlane.f32.xlu0 %v849
        %v851 = vpop.xlane.xlu0 %850
        %v852 = vsel %vm800, %v836, 0.0
        %853 = vadd.xlane.f32.xlu0 %v852
        %v854 = vpop.xlane.xlu0 %853
        %v855 = vrcp.pop %v839
        %v856 = vrcp.pop %v842
        %v857 = vrcp.pop %v845
        %v858 = vrcp.pop %v848
        %v859 = vrcp.pop %v851
        %v860 = vrcp.pop %v854
        %v861 = vmul.f32 %v826, %v855
        %v862 = vmul.f32 %v828, %v856
        %v863 = vmul.f32 %v830, %v857
        %v864 = vmul.f32 %v832, %v858
        %v865 = vmul.f32 %v834, %v859
        %v866 = vmul.f32 %v836, %v860
        %v867 = vpack.c.bf16 %v862, %v861
        %v868 = vpack.c.bf16 %v864, %v863
        %v869 = vpack.c.bf16 %v866, %v865
        %v870 = vpack.c.bf16 %v575, %v575
        %v872 = vsel %vm800, %v867, 0
        %v875 = vsel %vm800, %v868, 0
        %v878 = vsel %vm800, %v869, 0
        %vm880 = vcmask 1043456
        %v882 = vsel %vm880, %v870, 0
        %884 = vmatprep.subr.bf16.mxu0 0
        %885 = vmatpush1.bf16.msra.mxu0 %v882
        %886 = vmatprep.subr.bf16.mxu0 0
        %887 = vmatpush1.bf16.msra.mxu0 0
        %888 = vmatprep.subr.bf16.mxu0 0
        %889 = vmatpush1.bf16.msra.mxu0 0
        %890 = vmatprep.subr.bf16.mxu0 0
        %891 = vmatpush1.bf16.msra.mxu0 0
        %892 = vmatprep.subr.bf16.mxu0 0
        %893 = vmatpush1.bf16.msra.mxu0 0
        %894 = vmatprep.subr.bf16.mxu0 0
        %895 = vmatpush1.bf16.msra.mxu0 0
        %896 = vmatprep.subr.bf16.mxu0 0
        %897 = vmatpush1.bf16.msra.mxu0 0
        %898 = vmatprep.subr.bf16.mxu0 0
        %899 = vmatpush1.bf16.msra.mxu0 0
        %900 = vmatprep.subr.bf16.mxu0 0
        %901 = vmatpush1.bf16.msra.mxu0 0
        %902 = vmatprep.subr.bf16.mxu0 0
        %903 = vmatpush1.bf16.msra.mxu0 0
        %904 = vmatprep.subr.bf16.mxu0 0
        %905 = vmatpush1.bf16.msra.mxu0 0
        %906 = vmatprep.subr.bf16.mxu0 0
        %907 = vmatpush1.bf16.msra.mxu0 0
        %908 = vmatprep.subr.bf16.mxu0 0
        %909 = vmatpush1.bf16.msra.mxu0 0
        %910 = vmatprep.subr.bf16.mxu0 0
        %911 = vmatpush1.bf16.msra.mxu0 0
        %912 = vmatprep.subr.bf16.mxu0 0
        %913 = vmatpush1.bf16.msra.mxu0 0
        %914 = vmatprep.subr.bf16.mxu0 0
        %915 = vmatpush1.bf16.msra.mxu0 0
        %916 = vmatprep.mubr.bf16.mxu0 0
        %917 = vmatmul.mubr.bf16.gmra.mrb[0].mxu0 %v872
        %v918 = vpop.f32.mrb[0].mxu0
        %v919 = vadd.f32 0.0, %v918
        %v920 = vpop.f32.mrb[0].mxu0
        %v921 = vpop.f32.mrb[0].mxu0
        %v922 = vadd.f32 0.0, %v921
        %v923 = vpop.f32.mrb[0].mxu0
        %924 = vmatprep.mubr.bf16.mxu0 0
        %925 = vmatmul.mubr.bf16.gmra.mrb[0].mxu0 %v875
        %v926 = vpop.f32.mrb[0].mxu0
        %v927 = vadd.f32 0.0, %v926
        %v928 = vpop.f32.mrb[0].mxu0
        %v929 = vpop.f32.mrb[0].mxu0
        %v930 = vadd.f32 0.0, %v929
        %v931 = vpop.f32.mrb[0].mxu0
        %932 = vmatprep.mubr.bf16.mxu0 0
        %933 = vmatmul.mubr.bf16.gmra.mrb[0].mxu0 %v878
        %v934 = vpop.f32.mrb[0].mxu0
        %v935 = vadd.f32 0.0, %v934
        %v936 = vpop.f32.mrb[0].mxu0
        %v937 = vpop.f32.mrb[0].mxu0
        %v938 = vadd.f32 0.0, %v937
        %v939 = vpop.f32.mrb[0].mxu0
        %940 = vdwg.mxu0
        %942 = vrot.lane.b32.xlu0 %v922, 32
        %v943 = vpop.permute.xlu0 %942
        %946 = vrot.lane.b32.xlu0 %v927, 64
        %v947 = vpop.permute.xlu0 %946
        %950 = vrot.lane.b32.xlu0 %v930, 96
        %v951 = vpop.permute.xlu0 %950
        %954 = vrot.lane.b32.xlu0 %v938, 32
        %v955 = vpop.permute.xlu0 %954
        %v957 = vsel %vm536, %v919, %v943
        %vm958 = vcmask 523264
        %v959 = vsel %vm958, %v957, %v947
        %vm960 = vcmask 785408
        %v961 = vsel %vm960, %v959, %v951
        %v962 = vsel %vm536, %v935, %v955
        %v963 = vld [vmem:[%s7] sm:$0xf]
        %v964 = vld [vmem:[%s7 + $0x4] sm:$0xf]
        %v965 = vld [vmem:[%s7 + $0x8] sm:$0xf]
        %v966 = vld [vmem:[%s7 + $0xc] sm:$0xf]
        %v967 = vld [vmem:[%s7 + $0x10] sm:$0xf]
        %v968 = vld [vmem:[%s7 + $0x14] sm:$0xf]
        %v969 = vld [vmem:[%s7 + $0x18] sm:$0xf]
        %v970 = vld [vmem:[%s7 + $0x1c] sm:$0xf]
        %v971 = vld [vmem:[%s7 + $0x20] sm:$0xf]
        %v972 = vld [vmem:[%s7 + $0x24] sm:$0xf]
        %v973 = vld [vmem:[%s7 + $0x28] sm:$0xf]
        %v974 = vld [vmem:[%s7 + $0x2c] sm:$0xf]
        %v975 = vld [vmem:[%s7 + $0x30] sm:$0xf]
        %v976 = vld [vmem:[%s7 + $0x34] sm:$0xf]
        %v977 = vld [vmem:[%s7 + $0x38] sm:$0xf]
        %v978 = vld [vmem:[%s7 + $0x3c] sm:$0xf]
        %v979 = vld [vmem:[%s7 + $0x40] sm:$0xf]
        %v980 = vld [vmem:[%s7 + $0x44] sm:$0xf]
        %v981 = vld [vmem:[%s7 + $0x48] sm:$0xf]
        %v982 = vld [vmem:[%s7 + $0x4c] sm:$0xf]
        %v983 = vld [vmem:[%s7 + $0x50] sm:$0xf]
        %v984 = vld [vmem:[%s7 + $0x54] sm:$0xf]
        %v985 = vld [vmem:[%s7 + $0x58] sm:$0xf]
        %v986 = vld [vmem:[%s7 + $0x5c] sm:$0xf]
        %v987 = vpack.c.bf16 %v961, %v961
        %v988 = vpack.c.bf16 %v962, %v962
        %v1013 = vunpack.c.l.b16 %v963
        %v1014 = vunpack.c.l.b16 %v964
        %v1015 = vunpack.c.l.b16 %v965
        %v1016 = vunpack.c.l.b16 %v966
        %v1017 = vunpack.c.l.b16 %v967
        %v1018 = vunpack.c.l.b16 %v968
        %v1019 = vunpack.c.l.b16 %v969
        %v1020 = vunpack.c.l.b16 %v970
        %v1021 = vunpack.c.l.b16 %v971
        %v1022 = vunpack.c.l.b16 %v972
        %v1023 = vunpack.c.l.b16 %v973
        %v1024 = vunpack.c.l.b16 %v974
        %v1025 = vunpack.c.l.b16 %v975
        %v1026 = vunpack.c.l.b16 %v976
        %v1027 = vunpack.c.l.b16 %v977
        %v1028 = vunpack.c.l.b16 %v978
        %v1029 = vunpack.c.l.b16 %v979
        %v1030 = vunpack.c.l.b16 %v980
        %v1031 = vunpack.c.l.b16 %v981
        %v1032 = vunpack.c.l.b16 %v982
        %v1033 = vunpack.c.l.b16 %v983
        %v1034 = vunpack.c.l.b16 %v984
        %v1035 = vunpack.c.l.b16 %v985
        %v1036 = vunpack.c.l.b16 %v986
        %v1037 = vpack.c.b16 %v1014, %v1013
        %v1038 = vpack.c.b16 %v1016, %v1015
        %v1039 = vpack.c.b16 %v1018, %v1017
        %v1040 = vpack.c.b16 %v1020, %v1019
        %v1041 = vpack.c.b16 %v1022, %v1021
        %v1042 = vpack.c.b16 %v1024, %v1023
        %v1043 = vpack.c.b16 %v1026, %v1025
        %v1044 = vpack.c.b16 %v1028, %v1027
        %v1045 = vpack.c.b16 %v1030, %v1029
        %v1046 = vpack.c.b16 %v1032, %v1031
        %v1047 = vpack.c.b16 %v1034, %v1033
        %v1048 = vpack.c.b16 %v1036, %v1035
        %v1062 = vsel %vm958, %v988, 0
        %1064 = vmatprep.subr.bf16.mxu0 0
        %1065 = vmatpush1.bf16.msra.mxu0 %v1037
        %1066 = vmatprep.subr.bf16.mxu0 0
        %1067 = vmatpush1.bf16.msra.mxu0 %v1038
        %1068 = vmatprep.subr.bf16.mxu0 0
        %1069 = vmatpush1.bf16.msra.mxu0 %v1039
        %1070 = vmatprep.subr.bf16.mxu0 0
        %1071 = vmatpush1.bf16.msra.mxu0 %v1040
        %1072 = vmatprep.subr.bf16.mxu0 0
        %1073 = vmatpush1.bf16.msra.mxu0 %v1041
        %1074 = vmatprep.subr.bf16.mxu0 0
        %1075 = vmatpush1.bf16.msra.mxu0 %v1042
        %1076 = vmatprep.subr.bf16.mxu0 0
        %1077 = vmatpush1.bf16.msra.mxu0 %v1043
        %1078 = vmatprep.subr.bf16.mxu0 0
        %1079 = vmatpush1.bf16.msra.mxu0 %v1044
        %1080 = vmatprep.subr.bf16.mxu0 0
        %1081 = vmatpush1.bf16.msra.mxu0 %v1045
        %1082 = vmatprep.subr.bf16.mxu0 0
        %1083 = vmatpush1.bf16.msra.mxu0 %v1046
        %1084 = vmatprep.subr.bf16.mxu0 0
        %1085 = vmatpush1.bf16.msra.mxu0 %v1047
        %1086 = vmatprep.subr.bf16.mxu0 0
        %1087 = vmatpush1.bf16.msra.mxu0 %v1048
        %1088 = vmatprep.subr.bf16.mxu0 0
        %1089 = vmatpush1.bf16.msra.mxu0 0
        %1090 = vmatprep.subr.bf16.mxu0 0
        %1091 = vmatpush1.bf16.msra.mxu0 0
        %1092 = vmatprep.subr.bf16.mxu0 0
        %1093 = vmatpush1.bf16.msra.mxu0 0
        %1094 = vmatprep.subr.bf16.mxu0 0
        %1095 = vmatpush1.bf16.msra.mxu0 0
        %1096 = vmatprep.mubr.bf16.mxu0 %v1062
        %1097 = vmatmul.mubr.bf16.gmra.mrb[0].mxu0 %v987
        %v1098 = vpop.f32.mrb[0].mxu0
        %v1099 = vadd.f32 0.0, %v1098
        %v1100 = vpop.f32.mrb[0].mxu0
        %v1101 = vpop.f32.mrb[0].mxu0
        %v1102 = vpop.f32.mrb[0].mxu0
        %1103 = vdwg.mxu0
        %v1104 = vadd.f32 %v518, %v1099
        %v1105 = vmul.f32 %v1104, %v1104
        %v1106 = vsel %vm536, %v1105, 0.0
        %1107 = vadd.xlane.f32.xlu0 %v1106
        %v1108 = vpop.xlane.xlu0 %1107
        %v1109 = vrcp.pop 32.0
        %v1110 = vmul.f32 %v1108, %v1109
        %v1111 = vadd.f32 %v1110, 1.1920929e-07
        %v1112 = vrsqrt.pop %v1111
        %v1113 = vmul.f32 %v1104, %v1112
        %v1114 = vld [vmem:[%s8] sm:$0x1]
        %v1116 = vlaneseq
        %v1117 = vshrl.u32 %v1116, 7
        %v1118 = vsub.s32 0, %v1117
        %v1119 = vrot.slane %v1114, %v1118
        %v1121 = vmul.f32 %v1113, %v1119
        %v1122 = vld [vmem:[%s9] sm:$0xf]
        %v1123 = vld [vmem:[%s9 + $0x4] sm:$0xf]
        %v1124 = vld [vmem:[%s9 + $0x8] sm:$0xf]
        %v1125 = vld [vmem:[%s9 + $0xc] sm:$0xf]
        %v1126 = vpack.c.bf16 %v1121, %v1121
        %v1127 = vld [vmem:[%s10] sm:$0x1]
        %v1129 = vlaneseq
        %v1130 = vshrl.u32 %v1129, 7
        %v1131 = vsub.s32 0, %v1130
        %v1132 = vrot.slane %v1127, %v1131
        %v1138 = vunpack.c.l.b16 %v1122
        %v1139 = vunpack.c.l.b16 %v1123
        %v1140 = vunpack.c.l.b16 %v1124
        %v1141 = vunpack.c.l.b16 %v1125
        %v1142 = vpack.c.b16 %v1139, %v1138
        %v1143 = vpack.c.b16 %v1141, %v1140
        %v1147 = vsel %vm536, %v1126, 0
        %1149 = vmatprep.subr.bf16.mxu0 0
        %1150 = vmatpush1.bf16.msra.mxu0 %v1142
        %1151 = vmatprep.subr.bf16.mxu0 0
        %1152 = vmatpush1.bf16.msra.mxu0 %v1143
        %1153 = vmatprep.subr.bf16.mxu0 0
        %1154 = vmatpush1.bf16.msra.mxu0 0
        %1155 = vmatprep.subr.bf16.mxu0 0
        %1156 = vmatpush1.bf16.msra.mxu0 0
        %1157 = vmatprep.subr.bf16.mxu0 0
        %1158 = vmatpush1.bf16.msra.mxu0 0
        %1159 = vmatprep.subr.bf16.mxu0 0
        %1160 = vmatpush1.bf16.msra.mxu0 0
        %1161 = vmatprep.subr.bf16.mxu0 0
        %1162 = vmatpush1.bf16.msra.mxu0 0
        %1163 = vmatprep.subr.bf16.mxu0 0
        %1164 = vmatpush1.bf16.msra.mxu0 0
        %1165 = vmatprep.subr.bf16.mxu0 0
        %1166 = vmatpush1.bf16.msra.mxu0 0
        %1167 = vmatprep.subr.bf16.mxu0 0
        %1168 = vmatpush1.bf16.msra.mxu0 0
        %1169 = vmatprep.subr.bf16.mxu0 0
        %1170 = vmatpush1.bf16.msra.mxu0 0
        %1171 = vmatprep.subr.bf16.mxu0 0
        %1172 = vmatpush1.bf16.msra.mxu0 0
        %1173 = vmatprep.subr.bf16.mxu0 0
        %1174 = vmatpush1.bf16.msra.mxu0 0
        %1175 = vmatprep.subr.bf16.mxu0 0
        %1176 = vmatpush1.bf16.msra.mxu0 0
        %1177 = vmatprep.subr.bf16.mxu0 0
        %1178 = vmatpush1.bf16.msra.mxu0 0
        %1179 = vmatprep.subr.bf16.mxu0 0
        %1180 = vmatpush1.bf16.msra.mxu0 0
        %1181 = vmatprep.mubr.bf16.mxu0 0
        %1182 = vmatmul.mubr.bf16.gmra.mrb[0].mxu0 %v1147
        %v1183 = vpop.f32.mrb[0].mxu0
        %v1184 = vadd.f32 %v1132, %v1183
        %v1185 = vpop.f32.mrb[0].mxu0
        %v1186 = vpop.f32.mrb[0].mxu0
        %v1187 = vpop.f32.mrb[0].mxu0
        %1188 = vdwg.mxu0
        %v1189 = vld [vmem:[%s11] sm:$0xf]
        %v1190 = vld [vmem:[%s11 + $0x4] sm:$0xf]
        %v1191 = vld [vmem:[%s11 + $0x8] sm:$0xf]
        %v1192 = vld [vmem:[%s11 + $0xc] sm:$0xf]
        %v1193 = vld [vmem:[%s11 + $0x10] sm:$0xf]
        %v1194 = vld [vmem:[%s11 + $0x14] sm:$0xf]
        %v1195 = vld [vmem:[%s11 + $0x18] sm:$0xf]
        %v1196 = vld [vmem:[%s11 + $0x1c] sm:$0xf]
        %v1197 = vld [vmem:[%s11 + $0x20] sm:$0xf]
        %v1198 = vld [vmem:[%s11 + $0x24] sm:$0xf]
        %v1199 = vld [vmem:[%s11 + $0x28] sm:$0xf]
        %v1200 = vld [vmem:[%s11 + $0x2c] sm:$0xf]
        %v1201 = vld [vmem:[%s11 + $0x30] sm:$0xf]
        %v1202 = vld [vmem:[%s11 + $0x34] sm:$0xf]
        %v1203 = vld [vmem:[%s11 + $0x38] sm:$0xf]
        %v1204 = vld [vmem:[%s11 + $0x3c] sm:$0xf]
        %v1205 = vpack.c.bf16 %v1184, %v1184
        %v1222 = vunpack.c.l.b16 %v1189
        %v1223 = vunpack.c.l.b16 %v1190
        %v1224 = vunpack.c.l.b16 %v1191
        %v1225 = vunpack.c.l.b16 %v1192
        %v1226 = vunpack.c.l.b16 %v1193
        %v1227 = vunpack.c.l.b16 %v1194
        %v1228 = vunpack.c.l.b16 %v1195
        %v1229 = vunpack.c.l.b16 %v1196
        %v1230 = vunpack.c.l.b16 %v1197
        %v1231 = vunpack.c.l.b16 %v1198
        %v1232 = vunpack.c.l.b16 %v1199
        %v1233 = vunpack.c.l.b16 %v1200
        %v1234 = vunpack.c.l.b16 %v1201
        %v1235 = vunpack.c.l.b16 %v1202
        %v1236 = vunpack.c.l.b16 %v1203
        %v1237 = vunpack.c.l.b16 %v1204
        %v1238 = vpack.c.b16 %v1223, %v1222
        %v1239 = vpack.c.b16 %v1225, %v1224
        %v1240 = vpack.c.b16 %v1227, %v1226
        %v1241 = vpack.c.b16 %v1229, %v1228
        %v1242 = vpack.c.b16 %v1231, %v1230
        %v1243 = vpack.c.b16 %v1233, %v1232
        %v1244 = vpack.c.b16 %v1235, %v1234
        %v1245 = vpack.c.b16 %v1237, %v1236
        %1254 = vmatprep.subr.bf16.mxu0 0
        %1255 = vmatpush1.bf16.msra.mxu0 %v1238
        %1256 = vmatprep.subr.bf16.mxu0 0
        %1257 = vmatpush1.bf16.msra.mxu0 %v1239
        %1258 = vmatprep.subr.bf16.mxu0 0
        %1259 = vmatpush1.bf16.msra.mxu0 %v1240
        %1260 = vmatprep.subr.bf16.mxu0 0
        %1261 = vmatpush1.bf16.msra.mxu0 %v1241
        %1262 = vmatprep.subr.bf16.mxu0 0
        %1263 = vmatpush1.bf16.msra.mxu0 %v1242
        %1264 = vmatprep.subr.bf16.mxu0 0
        %1265 = vmatpush1.bf16.msra.mxu0 %v1243
        %1266 = vmatprep.subr.bf16.mxu0 0
        %1267 = vmatpush1.bf16.msra.mxu0 %v1244
        %1268 = vmatprep.subr.bf16.mxu0 0
        %1269 = vmatpush1.bf16.msra.mxu0 %v1245
        %1270 = vmatprep.subr.bf16.mxu0 0
        %1271 = vmatpush1.bf16.msra.mxu0 0
        %1272 = vmatprep.subr.bf16.mxu0 0
        %1273 = vmatpush1.bf16.msra.mxu0 0
        %1274 = vmatprep.subr.bf16.mxu0 0
        %1275 = vmatpush1.bf16.msra.mxu0 0
        %1276 = vmatprep.subr.bf16.mxu0 0
        %1277 = vmatpush1.bf16.msra.mxu0 0
        %1278 = vmatprep.subr.bf16.mxu0 0
        %1279 = vmatpush1.bf16.msra.mxu0 0
        %1280 = vmatprep.subr.bf16.mxu0 0
        %1281 = vmatpush1.bf16.msra.mxu0 0
        %1282 = vmatprep.subr.bf16.mxu0 0
        %1283 = vmatpush1.bf16.msra.mxu0 0
        %1284 = vmatprep.subr.bf16.mxu0 0
        %1285 = vmatpush1.bf16.msra.mxu0 0
        %1286 = vmatprep.mubr.bf16.mxu0 0
        %1287 = vmatmul.mubr.bf16.gmra.mrb[0].mxu0 %v1205
        %v1288 = vpop.f32.mrb[0].mxu0
        %v1289 = vadd.f32 0.0, %v1288
        %v1290 = vpop.f32.mrb[0].mxu0
        %v1291 = vpop.f32.mrb[0].mxu0
        %v1292 = vpop.f32.mrb[0].mxu0
        %1293 = vdwg.mxu0
        %v1294 = vld [vmem:[%s12] sm:$0xf]
        %v1295 = vld [vmem:[%s12 + $0x4] sm:$0xf]
        %v1296 = vld [vmem:[%s12 + $0x8] sm:$0xf]
        %v1297 = vld [vmem:[%s12 + $0xc] sm:$0xf]
        %v1298 = vld [vmem:[%s12 + $0x10] sm:$0xf]
        %v1299 = vld [vmem:[%s12 + $0x14] sm:$0xf]
        %v1300 = vld [vmem:[%s12 + $0x18] sm:$0xf]
        %v1301 = vld [vmem:[%s12 + $0x1c] sm:$0xf]
        %v1302 = vld [vmem:[%s12 + $0x20] sm:$0xf]
        %v1303 = vld [vmem:[%s12 + $0x24] sm:$0xf]
        %v1304 = vld [vmem:[%s12 + $0x28] sm:$0xf]
        %v1305 = vld [vmem:[%s12 + $0x2c] sm:$0xf]
        %v1306 = vld [vmem:[%s12 + $0x30] sm:$0xf]
        %v1307 = vld [vmem:[%s12 + $0x34] sm:$0xf]
        %v1308 = vld [vmem:[%s12 + $0x38] sm:$0xf]
        %v1309 = vld [vmem:[%s12 + $0x3c] sm:$0xf]
        %v1326 = vunpack.c.l.b16 %v1294
        %v1327 = vunpack.c.l.b16 %v1295
        %v1328 = vunpack.c.l.b16 %v1296
        %v1329 = vunpack.c.l.b16 %v1297
        %v1330 = vunpack.c.l.b16 %v1298
        %v1331 = vunpack.c.l.b16 %v1299
        %v1332 = vunpack.c.l.b16 %v1300
        %v1333 = vunpack.c.l.b16 %v1301
        %v1334 = vunpack.c.l.b16 %v1302
        %v1335 = vunpack.c.l.b16 %v1303
        %v1336 = vunpack.c.l.b16 %v1304
        %v1337 = vunpack.c.l.b16 %v1305
        %v1338 = vunpack.c.l.b16 %v1306
        %v1339 = vunpack.c.l.b16 %v1307
        %v1340 = vunpack.c.l.b16 %v1308
        %v1341 = vunpack.c.l.b16 %v1309
        %v1342 = vpack.c.b16 %v1327, %v1326
        %v1343 = vpack.c.b16 %v1329, %v1328
        %v1344 = vpack.c.b16 %v1331, %v1330
        %v1345 = vpack.c.b16 %v1333, %v1332
        %v1346 = vpack.c.b16 %v1335, %v1334
        %v1347 = vpack.c.b16 %v1337, %v1336
        %v1348 = vpack.c.b16 %v1339, %v1338
        %v1349 = vpack.c.b16 %v1341, %v1340
        %1358 = vmatprep.subr.bf16.mxu0 0
        %1359 = vmatpush1.bf16.msra.mxu0 %v1342
        %1360 = vmatprep.subr.bf16.mxu0 0
        %1361 = vmatpush1.bf16.msra.mxu0 %v1343
        %1362 = vmatprep.subr.bf16.mxu0 0
        %1363 = vmatpush1.bf16.msra.mxu0 %v1344
        %1364 = vmatprep.subr.bf16.mxu0 0
        %1365 = vmatpush1.bf16.msra.mxu0 %v1345
        %1366 = vmatprep.subr.bf16.mxu0 0
        %1367 = vmatpush1.bf16.msra.mxu0 %v1346
        %1368 = vmatprep.subr.bf16.mxu0 0
        %1369 = vmatpush1.bf16.msra.mxu0 %v1347
        %1370 = vmatprep.subr.bf16.mxu0 0
        %1371 = vmatpush1.bf16.msra.mxu0 %v1348
        %1372 = vmatprep.subr.bf16.mxu0 0
        %1373 = vmatpush1.bf16.msra.mxu0 %v1349
        %1374 = vmatprep.subr.bf16.mxu0 0
        %1375 = vmatpush1.bf16.msra.mxu0 0
        %1376 = vmatprep.subr.bf16.mxu0 0
        %1377 = vmatpush1.bf16.msra.mxu0 0
        %1378 = vmatprep.subr.bf16.mxu0 0
        %1379 = vmatpush1.bf16.msra.mxu0 0
        %1380 = vmatprep.subr.bf16.mxu0 0
        %1381 = vmatpush1.bf16.msra.mxu0 0
        %1382 = vmatprep.subr.bf16.mxu0 0
        %1383 = vmatpush1.bf16.msra.mxu0 0
        %1384 = vmatprep.subr.bf16.mxu0 0
        %1385 = vmatpush1.bf16.msra.mxu0 0
        %1386 = vmatprep.subr.bf16.mxu0 0
        %1387 = vmatpush1.bf16.msra.mxu0 0
        %1388 = vmatprep.subr.bf16.mxu0 0
        %1389 = vmatpush1.bf16.msra.mxu0 0
        %1390 = vmatprep.mubr.bf16.mxu0 0
        %1391 = vmatmul.mubr.bf16.gmra.mrb[0].mxu0 %v1205
        %v1392 = vpop.f32.mrb[0].mxu0
        %v1393 = vadd.f32 0.0, %v1392
        %v1394 = vpop.f32.mrb[0].mxu0
        %v1395 = vpop.f32.mrb[0].mxu0
        %v1396 = vpop.f32.mrb[0].mxu0
        %1397 = vdwg.mxu0
        %v1398 = vmul.f32 %v1289, 0.5
        %v1399 = vmul.f32 %v1289, 0.70710677
        %v1400 = verf.f32.pop %v1399
        %v1401 = vadd.f32 %v1400, 1.0
        %v1402 = vmul.f32 %v1398, %v1401
        %v1403 = vmul.f32 %v1402, %v1393
        %v1404 = vld [vmem:[%s13] sm:$0xf]
        %v1405 = vld [vmem:[%s13 + $0x4] sm:$0xf]
        %v1406 = vld [vmem:[%s13 + $0x8] sm:$0xf]
        %v1407 = vld [vmem:[%s13 + $0xc] sm:$0xf]
        %v1408 = vld [vmem:[%s13 + $0x10] sm:$0xf]
        %v1409 = vld [vmem:[%s13 + $0x14] sm:$0xf]
        %v1410 = vld [vmem:[%s13 + $0x18] sm:$0xf]
        %v1411 = vld [vmem:[%s13 + $0x1c] sm:$0xf]
        %v1412 = vld [vmem:[%s13 + $0x20] sm:$0xf]
        %v1413 = vld [vmem:[%s13 + $0x24] sm:$0xf]
        %v1414 = vld [vmem:[%s13 + $0x28] sm:$0xf]
        %v1415 = vld [vmem:[%s13 + $0x2c] sm:$0xf]
        %v1416 = vld [vmem:[%s13 + $0x30] sm:$0xf]
        %v1417 = vld [vmem:[%s13 + $0x34] sm:$0xf]
        %v1418 = vld [vmem:[%s13 + $0x38] sm:$0xf]
        %v1419 = vld [vmem:[%s13 + $0x3c] sm:$0xf]
        %v1420 = vpack.c.bf16 %v1403, %v1403
        %v1437 = vunpack.c.l.b16 %v1404
        %v1438 = vunpack.c.l.b16 %v1405
        %v1439 = vunpack.c.l.b16 %v1406
        %v1440 = vunpack.c.l.b16 %v1407
        %v1441 = vunpack.c.l.b16 %v1408
        %v1442 = vunpack.c.l.b16 %v1409
        %v1443 = vunpack.c.l.b16 %v1410
        %v1444 = vunpack.c.l.b16 %v1411
        %v1445 = vunpack.c.l.b16 %v1412
        %v1446 = vunpack.c.l.b16 %v1413
        %v1447 = vunpack.c.l.b16 %v1414
        %v1448 = vunpack.c.l.b16 %v1415
        %v1449 = vunpack.c.l.b16 %v1416
        %v1450 = vunpack.c.l.b16 %v1417
        %v1451 = vunpack.c.l.b16 %v1418
        %v1452 = vunpack.c.l.b16 %v1419
        %v1453 = vpack.c.b16 %v1438, %v1437
        %v1454 = vpack.c.b16 %v1440, %v1439
        %v1455 = vpack.c.b16 %v1442, %v1441
        %v1456 = vpack.c.b16 %v1444, %v1443
        %v1457 = vpack.c.b16 %v1446, %v1445
        %v1458 = vpack.c.b16 %v1448, %v1447
        %v1459 = vpack.c.b16 %v1450, %v1449
        %v1460 = vpack.c.b16 %v1452, %v1451
        %1469 = vmatprep.subr.bf16.mxu0 0
        %1470 = vmatpush1.bf16.msra.mxu0 %v1453
        %1471 = vmatprep.subr.bf16.mxu0 0
        %1472 = vmatpush1.bf16.msra.mxu0 %v1454
        %1473 = vmatprep.subr.bf16.mxu0 0
        %1474 = vmatpush1.bf16.msra.mxu0 %v1455
        %1475 = vmatprep.subr.bf16.mxu0 0
        %1476 = vmatpush1.bf16.msra.mxu0 %v1456
        %1477 = vmatprep.subr.bf16.mxu0 0
        %1478 = vmatpush1.bf16.msra.mxu0 %v1457
        %1479 = vmatprep.subr.bf16.mxu0 0
        %1480 = vmatpush1.bf16.msra.mxu0 %v1458
        %1481 = vmatprep.subr.bf16.mxu0 0
        %1482 = vmatpush1.bf16.msra.mxu0 %v1459
        %1483 = vmatprep.subr.bf16.mxu0 0
        %1484 = vmatpush1.bf16.msra.mxu0 %v1460
        %1485 = vmatprep.subr.bf16.mxu0 0
        %1486 = vmatpush1.bf16.msra.mxu0 0
        %1487 = vmatprep.subr.bf16.mxu0 0
        %1488 = vmatpush1.bf16.msra.mxu0 0
        %1489 = vmatprep.subr.bf16.mxu0 0
        %1490 = vmatpush1.bf16.msra.mxu0 0
        %1491 = vmatprep.subr.bf16.mxu0 0
        %1492 = vmatpush1.bf16.msra.mxu0 0
        %1493 = vmatprep.subr.bf16.mxu0 0
        %1494 = vmatpush1.bf16.msra.mxu0 0
        %1495 = vmatprep.subr.bf16.mxu0 0
        %1496 = vmatpush1.bf16.msra.mxu0 0
        %1497 = vmatprep.subr.bf16.mxu0 0
        %1498 = vmatpush1.bf16.msra.mxu0 0
        %1499 = vmatprep.subr.bf16.mxu0 0
        %1500 = vmatpush1.bf16.msra.mxu0 0
        %1501 = vmatprep.mubr.bf16.mxu0 0
        %1502 = vmatmul.mubr.bf16.gmra.mrb[0].mxu0 %v1420
        %v1503 = vpop.f32.mrb[0].mxu0
        %v1504 = vadd.f32 0.0, %v1503
        %v1505 = vpop.f32.mrb[0].mxu0
        %v1506 = vpop.f32.mrb[0].mxu0
        %v1507 = vpop.f32.mrb[0].mxu0
        %1508 = vdwg.mxu0
        %v1509 = vld [vmem:[%s14] sm:$0xf]
        %v1510 = vld [vmem:[%s14 + $0x4] sm:$0xf]
        %v1511 = vld [vmem:[%s14 + $0x8] sm:$0xf]
        %v1512 = vld [vmem:[%s14 + $0xc] sm:$0xf]
        %v1513 = vld [vmem:[%s14 + $0x10] sm:$0xf]
        %v1514 = vld [vmem:[%s14 + $0x14] sm:$0xf]
        %v1515 = vld [vmem:[%s14 + $0x18] sm:$0xf]
        %v1516 = vld [vmem:[%s14 + $0x1c] sm:$0xf]
        %v1517 = vld [vmem:[%s14 + $0x20] sm:$0xf]
        %v1518 = vld [vmem:[%s14 + $0x24] sm:$0xf]
        %v1519 = vld [vmem:[%s14 + $0x28] sm:$0xf]
        %v1520 = vld [vmem:[%s14 + $0x2c] sm:$0xf]
        %v1521 = vld [vmem:[%s14 + $0x30] sm:$0xf]
        %v1522 = vld [vmem:[%s14 + $0x34] sm:$0xf]
        %v1523 = vld [vmem:[%s14 + $0x38] sm:$0xf]
        %v1524 = vld [vmem:[%s14 + $0x3c] sm:$0xf]
        %v1525 = vpack.c.bf16 %v1504, %v1504
        %v1526 = vld [vmem:[%s15] sm:$0x1]
        %v1528 = vlaneseq
        %v1529 = vshrl.u32 %v1528, 7
        %v1530 = vsub.s32 0, %v1529
        %v1531 = vrot.slane %v1526, %v1530
        %v1549 = vunpack.c.l.b16 %v1509
        %v1550 = vunpack.c.l.b16 %v1510
        %v1551 = vunpack.c.l.b16 %v1511
        %v1552 = vunpack.c.l.b16 %v1512
        %v1553 = vunpack.c.l.b16 %v1513
        %v1554 = vunpack.c.l.b16 %v1514
        %v1555 = vunpack.c.l.b16 %v1515
        %v1556 = vunpack.c.l.b16 %v1516
        %v1557 = vunpack.c.l.b16 %v1517
        %v1558 = vunpack.c.l.b16 %v1518
        %v1559 = vunpack.c.l.b16 %v1519
        %v1560 = vunpack.c.l.b16 %v1520
        %v1561 = vunpack.c.l.b16 %v1521
        %v1562 = vunpack.c.l.b16 %v1522
        %v1563 = vunpack.c.l.b16 %v1523
        %v1564 = vunpack.c.l.b16 %v1524
        %v1565 = vpack.c.b16 %v1550, %v1549
        %v1566 = vpack.c.b16 %v1552, %v1551
        %v1567 = vpack.c.b16 %v1554, %v1553
        %v1568 = vpack.c.b16 %v1556, %v1555
        %v1569 = vpack.c.b16 %v1558, %v1557
        %v1570 = vpack.c.b16 %v1560, %v1559
        %v1571 = vpack.c.b16 %v1562, %v1561
        %v1572 = vpack.c.b16 %v1564, %v1563
        %1581 = vmatprep.subr.bf16.mxu0 0
        %1582 = vmatpush1.bf16.msra.mxu0 %v1565
        %1583 = vmatprep.subr.bf16.mxu0 0
        %1584 = vmatpush1.bf16.msra.mxu0 %v1566
        %1585 = vmatprep.subr.bf16.mxu0 0
        %1586 = vmatpush1.bf16.msra.mxu0 %v1567
        %1587 = vmatprep.subr.bf16.mxu0 0
        %1588 = vmatpush1.bf16.msra.mxu0 %v1568
        %1589 = vmatprep.subr.bf16.mxu0 0
        %1590 = vmatpush1.bf16.msra.mxu0 %v1569
        %1591 = vmatprep.subr.bf16.mxu0 0
        %1592 = vmatpush1.bf16.msra.mxu0 %v1570
        %1593 = vmatprep.subr.bf16.mxu0 0
        %1594 = vmatpush1.bf16.msra.mxu0 %v1571
        %1595 = vmatprep.subr.bf16.mxu0 0
        %1596 = vmatpush1.bf16.msra.mxu0 %v1572
        %1597 = vmatprep.subr.bf16.mxu0 0
        %1598 = vmatpush1.bf16.msra.mxu0 0
        %1599 = vmatprep.subr.bf16.mxu0 0
        %1600 = vmatpush1.bf16.msra.mxu0 0
        %1601 = vmatprep.subr.bf16.mxu0 0
        %1602 = vmatpush1.bf16.msra.mxu0 0
        %1603 = vmatprep.subr.bf16.mxu0 0
        %1604 = vmatpush1.bf16.msra.mxu0 0
        %1605 = vmatprep.subr.bf16.mxu0 0
        %1606 = vmatpush1.bf16.msra.mxu0 0
        %1607 = vmatprep.subr.bf16.mxu0 0
        %1608 = vmatpush1.bf16.msra.mxu0 0
        %1609 = vmatprep.subr.bf16.mxu0 0
        %1610 = vmatpush1.bf16.msra.mxu0 0
        %1611 = vmatprep.subr.bf16.mxu0 0
        %1612 = vmatpush1.bf16.msra.mxu0 0
        %1613 = vmatprep.mubr.bf16.mxu0 0
        %1614 = vmatmul.mubr.bf16.gmra.mrb[0].mxu0 %v1525
        %v1615 = vpop.f32.mrb[0].mxu0
        %v1616 = vadd.f32 %v1531, %v1615
        %v1617 = vpop.f32.mrb[0].mxu0
        %v1618 = vpop.f32.mrb[0].mxu0
        %v1619 = vpop.f32.mrb[0].mxu0
        %1620 = vdwg.mxu0
        %v1621 = vadd.f32 %v1121, %v1616
        %v1622 = vmul.f32 %v1621, %v1621
        %v1623 = vsel %vm536, %v1622, 0.0
        %1624 = vadd.xlane.f32.xlu0 %v1623
        %v1625 = vpop.xlane.xlu0 %1624
        %v1626 = vmul.f32 %v1625, %v1109
        %v1627 = vadd.f32 %v1626, 1.1920929e-07
        %v1628 = vrsqrt.pop %v1627
        %v1629 = vmul.f32 %v1621, %v1628
        %v1630 = vmul.f32 %v1629, %v1119
        %1631 = vst.msk [vmem:[%s512] sm:$0xff] %vm536, %v1630
        %s1632 = sand.u32 %s379, 1
        %s1633 = scalar_lea.sflag [#allocation3], %s1632
        %s1634 = sand.u32 %s379, 1
        %s1635 = smul.addr %s1634, 8
        %s1636 = scalar_lea.vmem [#allocation2], %s1635
        // Predicated region
        $region85: #{_lambda_.1} parent=83 // pred_check
          %p1637 = pneg %p389
        $region86: #{_lambda_.1} parent=83 // pred_check_branch
          %1639 = sbr.rel (%p1637) target = $region88
        $region87: #{_lambda_.1} parent=83 // pred_region
          %s1641 = ssub.s32 128, 128
          %1642 = vsyncadd %s1633, %s1641
          %s1643 = smul.addr %s30, 128
          %s1644 = scalar_lea.hbm %s16, %s1643
          %s1646 = sshll.u32 %s1636, 4
          %s1647 = int_to_ptr.vmem [resolvable:$true] %s1646
          %1649 = dma.vmem_to_hbm [thread:$0]  %s1647, 128, %s1644, %s1633
        $region88: #{_lambda_.1} parent=83 // pred_fallthru
          _
      $region84: #{_lambda_.1} parent=5 // pred_fallthru
        _
      %p1650 = scmp.le.s32.totalorder 2, %s25
      // Predicated region
      $region89: #{_lambda_.1} parent=5 // pred_check
        %p1651 = pneg %p1650
      $region90: #{_lambda_.1} parent=5 // pred_check_branch
        %1653 = sbr.rel (%p1651) target = $region92
      $region91: #{_lambda_.1} parent=5 // pred_region
        %s1654 = ssub.s32 %s25, 2
        // Predicated region
        $region93: #{_lambda_.1} parent=91 // pred_check
          %p1655 = pneg %p395
        $region94: #{_lambda_.1} parent=91 // pred_check_branch
          %1657 = sbr.rel (%p1655) target = $region96
        $region95: #{_lambda_.1} parent=91 // pred_region
          %s1658 = sand.u32 %s380, 1
          %s1659 = scalar_lea.sflag [#allocation3], %s1658
          %s1660 = sand.u32 %s380, 1
          %s1661 = smul.addr %s1660, 8
          %s1662 = scalar_lea.vmem [#allocation2], %s1661
          %1663 = dma.done %s1659, 128
        $region96: #{_lambda_.1} parent=91 // pred_fallthru
          _
      $region92: #{_lambda_.1} parent=5 // pred_fallthru
        _
    $region6: #{_lambda_.1} parent=1 // loop_footer
      %s29 = sadd.s32 1, %s25
    $region7: #{_lambda_.1} parent=1 // loop_footer_branch
      %24 = sbr.rel target = $region3
    $region8: #{_lambda_.1} parent=1 // loop_exit
      _
    %1664 = vsyncpa [#allocation3], 1
    %s1665 = scalar_lea.sflag [#allocation3], 1
    %1666 = vsyncpa %s1665, 1

</llo_original>
